<compile_context>
chip_gen: v7x
topology: tpu7x:2x2x1
jax: 0.10.0
libtpu: 0.0.40
codegen_flags: <defaults>
</compile_context>

<pallas_src>
import jax
import jax.numpy as jnp
from jax.experimental import pallas as pl
from jax.experimental.pallas import tpu as pltpu

# ----- hyperparameters implied by the module's __init__ (module-level consts) -----
RU_NUM_EMBEDDINGS = 10
MO_NUM_EMBEDDINGS = 12
CNN_IN_CHANNELS = 4
CNN_OUT_CHANNELS1 = 8
CNN_KERNEL_SIZE1 = 3
HIDDEN_SIZE = 32
NUM_LAYERS = 2
RU_EMBEDDING_DIM = 8
MO_EMBEDDING_DIM = 8
STATIC_FEATURE_DIM = 6
FC_HIDDEN_DIM = 32
DROPOUT_PROB = 0.1  # eval mode -> dropout is identity

BATCH = 8
SEQ_LEN = 12

H = HIDDEN_SIZE
LANE = 32                                   # slab width (>= every weight's out-dim)
KC = CNN_KERNEL_SIZE1 * CNN_IN_CHANNELS     # 12
KC_PAD = 16                                 # conv block rows, multiple of 8

assert NUM_LAYERS == 2, "wavefront-interleaved kernel is specialized for 2 RNN layers"
assert HIDDEN_SIZE == 32 and FC_HIDDEN_DIM == 32 and CNN_OUT_CHANNELS1 <= LANE
assert RU_EMBEDDING_DIM + MO_EMBEDDING_DIM + STATIC_FEATURE_DIM <= LANE

# row offsets inside the packed weight slab (all multiples of 8)
OFF_CONV = 0                       # (KC_PAD, LANE)  im2col conv weight (zero-padded)
OFF_WIH0 = OFF_CONV + KC_PAD       # 16  (32, LANE)  wih0.T padded with zero rows
OFF_WHH0 = OFF_WIH0 + 32           # 48  (32, LANE)  whh0.T
OFF_W1STK = OFF_WHH0 + 32          # 80  (64, LANE)  [wih1.T ; whh1.T]
OFF_W1S = OFF_W1STK + 64           # 144 (32, LANE)  fc1_w[:, :H].T
OFF_W1T = OFF_W1S + 32             # 176 (32, LANE)  fc1_w[:, H:].T padded
OFF_W2 = OFF_W1T + 32              # 208 (32, LANE)  fc2_w.T padded
W_ROWS = OFF_W2 + 32               # 240


def _silu(v):
    # exact sigmoid*x; exp rides the EUP slot, divide kept exact for tolerance
    return v * (1.0 / (1.0 + jnp.exp(-v)))


def _make_kernel(B: int, Tp: int):
    """Fused forward kernel; time loop statically unrolled, layers wavefronted."""

    def kernel(patches_ref, tail_ref, w_ref, b_ref, out_ref, pre0_scr):
        f32 = jnp.float32

        # ---- unpack packed weight / bias slabs (static, aligned slices) ----
        conv_w = w_ref[pl.ds(OFF_CONV, KC_PAD), :]
        wih0 = w_ref[pl.ds(OFF_WIH0, 32), :]
        whh0 = w_ref[pl.ds(OFF_WHH0, 32), :]
        wih1 = w_ref[pl.ds(OFF_W1STK, 32), :]      # top half of the stack (t=0 peel)
        w1stk = w_ref[pl.ds(OFF_W1STK, 64), :]     # [wih1.T ; whh1.T]
        w1s = w_ref[pl.ds(OFF_W1S, 32), :]
        w1t = w_ref[pl.ds(OFF_W1T, 32), :]
        w2 = w_ref[pl.ds(OFF_W2, 32), :]

        conv_b = b_ref[pl.ds(0, 1), :]
        b0 = b_ref[pl.ds(1, 1), :]                 # b_ih0 + b_hh0
        b1 = b_ref[pl.ds(2, 1), :]                 # b_ih1 + b_hh1
        fc1_b = b_ref[pl.ds(3, 1), :]
        fc2_b = b_ref[pl.ds(4, 1), :]              # only col 0 meaningful

        # ---- Conv1d (valid, stride 1) as ONE im2col matmul + bias + SiLU ----
        conv_out = _silu(
            jnp.dot(patches_ref[...], conv_w, preferred_element_type=f32)
            + conv_b)                              # (Tp*B, 32); cols >= Cout are 0

        # ---- layer-0 input projection hoisted out of the serial time loop ----
        pre0_scr[...] = (
            jnp.dot(conv_out, wih0, preferred_element_type=f32) + b0)

        # ---- wavefront-interleaved 2-layer tanh RNN, t = 0 peeled (h_{-1}=0) ----
        h0 = jnp.tanh(pre0_scr[pl.ds(0, B), :])
        h1 = jnp.tanh(jnp.dot(h0, wih1, preferred_element_type=f32) + b1)
        for t in range(1, Tp):
            h0 = jnp.tanh(
                pre0_scr[pl.ds(t * B, B), :]
                + jnp.dot(h0, whh0, preferred_element_type=f32))
            h1 = jnp.tanh(
                jnp.dot(jnp.concatenate([h0, h1], axis=1), w1stk,
                        preferred_element_type=f32)
                + b1)
        # TODO(synk): inter-layer RNN dropout and self.drop omitted (eval-mode identity).
        seq_feat = h1                              # (B, H) == h_n[-1]

        # ---- head: fc1 split over [seq_feat | ru_emb|mo_emb|static], SiLU, fc2 ----
        hfc = _silu(
            jnp.dot(seq_feat, w1s, preferred_element_type=f32)
            + jnp.dot(tail_ref[...], w1t, preferred_element_type=f32)
            + fc1_b)
        final = jnp.dot(hfc, w2, preferred_element_type=f32) + fc2_b   # (B, 32)
        out_ref[...] = final[:, 0:1]                                   # (B, 1)

    return kernel


def init_params(key):
    ks = jax.random.split(key, 20)

    def u(k, shape, fan_in):
        bound = 1.0 / jnp.sqrt(jnp.float32(fan_in))
        return jax.random.uniform(k, shape, jnp.float32, -bound, bound)

    p = {}
    p['conv_w'] = u(ks[0], (CNN_OUT_CHANNELS1, CNN_IN_CHANNELS, CNN_KERNEL_SIZE1),
                    CNN_IN_CHANNELS * CNN_KERNEL_SIZE1)
    p['conv_b'] = u(ks[1], (CNN_OUT_CHANNELS1,), CNN_IN_CHANNELS * CNN_KERNEL_SIZE1)

    ki = 2
    for l in range(NUM_LAYERS):
        in_dim = CNN_OUT_CHANNELS1 if l == 0 else HIDDEN_SIZE
        p[f'w_ih_{l}'] = u(ks[ki + 0], (HIDDEN_SIZE, in_dim), HIDDEN_SIZE)
        p[f'w_hh_{l}'] = u(ks[ki + 1], (HIDDEN_SIZE, HIDDEN_SIZE), HIDDEN_SIZE)
        p[f'b_ih_{l}'] = u(ks[ki + 2], (HIDDEN_SIZE,), HIDDEN_SIZE)
        p[f'b_hh_{l}'] = u(ks[ki + 3], (HIDDEN_SIZE,), HIDDEN_SIZE)
        ki += 4

    p['ru_emb'] = jax.random.normal(ks[ki + 0], (RU_NUM_EMBEDDINGS, RU_EMBEDDING_DIM),
                                    jnp.float32)
    p['mo_emb'] = jax.random.normal(ks[ki + 1], (MO_NUM_EMBEDDINGS, MO_EMBEDDING_DIM),
                                    jnp.float32)

    combined_dim = HIDDEN_SIZE + RU_EMBEDDING_DIM + MO_EMBEDDING_DIM + STATIC_FEATURE_DIM
    p['fc1_w'] = u(ks[ki + 2], (FC_HIDDEN_DIM, combined_dim), combined_dim)
    p['fc1_b'] = u(ks[ki + 3], (FC_HIDDEN_DIM,), combined_dim)
    p['fc2_w'] = u(ks[ki + 4], (1, FC_HIDDEN_DIM), FC_HIDDEN_DIM)
    p['fc2_b'] = u(ks[ki + 5], (1,), FC_HIDDEN_DIM)
    return p


def forward(params, x_seq, x_static, ru_idx, mo_idx):
    B, T, Cin = x_seq.shape
    K = CNN_KERNEL_SIZE1
    Tp = T - K + 1
    f32 = jnp.float32

    # --- glue: im2col, embedding gathers, slab packing (free XLA ops) ---
    # time-major patches: row t*B + b, col k*Cin + c  ==  x_seq[b, t+k, c]
    windows = jnp.stack([x_seq[:, k:k + Tp, :] for k in range(K)], axis=2)  # (B,Tp,K,Cin)
    patches = jnp.transpose(windows, (1, 0, 2, 3)).reshape(Tp * B, K * Cin)
    patches_p = jnp.zeros((Tp * B, KC_PAD), f32).at[:, :K * Cin].set(patches)

    def block(a, rows, cols=LANE):
        z = jnp.zeros((rows, cols), f32)
        return z.at[:a.shape[0], :a.shape[1]].set(a.astype(f32))

    # (K*Cin, Cout) with row index k*Cin + c, matching the patch columns
    conv_wT = jnp.transpose(params['conv_w'], (2, 1, 0)).reshape(K * Cin, CNN_OUT_CHANNELS1)

    w_slab = jnp.concatenate([
        block(conv_wT, KC_PAD),                                               # OFF_CONV
        block(params['w_ih_0'].T, 32),                                        # OFF_WIH0
        block(params['w_hh_0'].T, 32),                                        # OFF_WHH0
        block(jnp.concatenate([params['w_ih_1'].T, params['w_hh_1'].T], 0), 64),  # OFF_W1STK
        block(params['fc1_w'][:, :H].T, 32),                                  # OFF_W1S
        block(params['fc1_w'][:, H:].T, 32),                                  # OFF_W1T
        block(params['fc2_w'].T, 32),                                         # OFF_W2
    ], axis=0)
    assert w_slab.shape == (W_ROWS, LANE)

    b_slab = jnp.zeros((8, LANE), f32)
    b_slab = b_slab.at[0, :CNN_OUT_CHANNELS1].set(params['conv_b'])
    b_slab = b_slab.at[1, :].set(params['b_ih_0'] + params['b_hh_0'])
    b_slab = b_slab.at[2, :].set(params['b_ih_1'] + params['b_hh_1'])
    b_slab = b_slab.at[3, :].set(params['fc1_b'])
    b_slab = b_slab.at[4, 0].set(params['fc2_b'][0])

    ru_e = jnp.take(params['ru_emb'], ru_idx, axis=0)
    mo_e = jnp.take(params['mo_emb'], mo_idx, axis=0)
    tail = jnp.concatenate([ru_e, mo_e, x_static], axis=1)      # (B, ru+mo+static)
    tail_p = jnp.zeros((B, LANE), f32).at[:, :tail.shape[1]].set(tail)

    vmem = pl.BlockSpec(memory_space=pltpu.MemorySpace.VMEM)
    out = pl.pallas_call(
        _make_kernel(B, Tp),
        out_shape=jax.ShapeDtypeStruct((B, 1), jnp.float32),
        in_specs=[vmem, vmem, vmem, vmem],
        out_specs=vmem,
        scratch_shapes=[pltpu.VMEM((Tp * B, H), jnp.float32)],   # hoisted layer-0 projections
    )(patches_p, tail_p, w_slab, b_slab)
    return out[:, 0]                                             # == out.squeeze(1)


def reference(params, x_seq, x_static, ru_idx, mo_idx):
    """Pure-JAX replica of the PyTorch forward (eval mode)."""
    K = CNN_KERNEL_SIZE1
    T = x_seq.shape[1]
    Tp = T - K + 1
    B = x_seq.shape[0]

    seq = []
    for t in range(Tp):
        acc = params['conv_b']
        for k in range(K):
            acc = acc + x_seq[:, t + k, :] @ params['conv_w'][:, :, k].T
        seq.append(jax.nn.silu(acc))

    for l in range(NUM_LAYERS):
        wih, whh = params[f'w_ih_{l}'], params[f'w_hh_{l}']
        b = params[f'b_ih_{l}'] + params[f'b_hh_{l}']
        h = jnp.zeros((B, HIDDEN_SIZE), jnp.float32)
        outs = []
        for t in range(Tp):
            h = jnp.tanh(seq[t] @ wih.T + h @ whh.T + b)
            outs.append(h)
        seq = outs
    seq_feat = seq[-1]

    ru_e = params['ru_emb'][ru_idx]
    mo_e = params['mo_emb'][mo_idx]
    combined = jnp.concatenate([seq_feat, ru_e, mo_e, x_static], axis=1)
    h = jax.nn.silu(combined @ params['fc1_w'].T + params['fc1_b'])
    out = h @ params['fc2_w'].T + params['fc2_b']
    return out[:, 0]


if __name__ == "__main__":
    key = jax.random.PRNGKey(0)
    pkey, k1, k2, k3, k4 = jax.random.split(key, 5)
    params = init_params(pkey)

    x_seq = jax.random.normal(k1, (BATCH, SEQ_LEN, CNN_IN_CHANNELS), jnp.float32)
    x_static = jax.random.normal(k2, (BATCH, STATIC_FEATURE_DIM), jnp.float32)
    ru_idx = jax.random.randint(k3, (BATCH,), 0, RU_NUM_EMBEDDINGS)
    mo_idx = jax.random.randint(k4, (BATCH,), 0, MO_NUM_EMBEDDINGS)

    out = forward(params, x_seq, x_static, ru_idx, mo_idx)
    out = jax.block_until_ready(out)

    ref = reference(params, x_seq, x_static, ru_idx, mo_idx)
    assert out.shape == (BATCH,)
    assert bool(jnp.allclose(out, ref, atol=1e-4, rtol=1e-4)), (out, ref)
    print("KERNEL_OK")
</pallas_src>

<mosaic_0001>
module attributes {stable_mosaic.version = 11 : i64} {
  func.func @kernel(%arg0: memref<80x16xf32, #tpu.memory_space<vmem>>, %arg1: memref<8x32xf32, #tpu.memory_space<vmem>>, %arg2: memref<240x32xf32, #tpu.memory_space<vmem>>, %arg3: memref<8x32xf32, #tpu.memory_space<vmem>>, %arg4: memref<8x1xf32, #tpu.memory_space<vmem>>, %arg5: memref<80x32xf32, #tpu.memory_space<vmem>>) attributes {dimension_semantics = [], scalar_prefetch = 0 : i64, scratch_operands = 1 : i64, tpu.core_type = #tpu.core_type<tc>} {
    %c0 = arith.constant 0 : index
    %c0_0 = arith.constant 0 : index
    %0 = vector.load %arg2[%c0, %c0_0] : memref<240x32xf32, #tpu.memory_space<vmem>>, vector<16x32xf32>
    %c16 = arith.constant 16 : index
    %c0_1 = arith.constant 0 : index
    %1 = vector.load %arg2[%c16, %c0_1] : memref<240x32xf32, #tpu.memory_space<vmem>>, vector<32x32xf32>
    %c48 = arith.constant 48 : index
    %c0_2 = arith.constant 0 : index
    %2 = vector.load %arg2[%c48, %c0_2] : memref<240x32xf32, #tpu.memory_space<vmem>>, vector<32x32xf32>
    %c80 = arith.constant 80 : index
    %c0_3 = arith.constant 0 : index
    %3 = vector.load %arg2[%c80, %c0_3] : memref<240x32xf32, #tpu.memory_space<vmem>>, vector<32x32xf32>
    %c80_4 = arith.constant 80 : index
    %c0_5 = arith.constant 0 : index
    %4 = vector.load %arg2[%c80_4, %c0_5] : memref<240x32xf32, #tpu.memory_space<vmem>>, vector<64x32xf32>
    %c144 = arith.constant 144 : index
    %c0_6 = arith.constant 0 : index
    %5 = vector.load %arg2[%c144, %c0_6] : memref<240x32xf32, #tpu.memory_space<vmem>>, vector<32x32xf32>
    %c176 = arith.constant 176 : index
    %c0_7 = arith.constant 0 : index
    %6 = vector.load %arg2[%c176, %c0_7] : memref<240x32xf32, #tpu.memory_space<vmem>>, vector<32x32xf32>
    %c208 = arith.constant 208 : index
    %c0_8 = arith.constant 0 : index
    %7 = vector.load %arg2[%c208, %c0_8] : memref<240x32xf32, #tpu.memory_space<vmem>>, vector<32x32xf32>
    %c0_9 = arith.constant 0 : index
    %c0_10 = arith.constant 0 : index
    %8 = vector.load %arg3[%c0_9, %c0_10] : memref<8x32xf32, #tpu.memory_space<vmem>>, vector<1x32xf32>
    %c1 = arith.constant 1 : index
    %c0_11 = arith.constant 0 : index
    %9 = vector.load %arg3[%c1, %c0_11] : memref<8x32xf32, #tpu.memory_space<vmem>>, vector<1x32xf32>
    %c2 = arith.constant 2 : index
    %c0_12 = arith.constant 0 : index
    %10 = vector.load %arg3[%c2, %c0_12] : memref<8x32xf32, #tpu.memory_space<vmem>>, vector<1x32xf32>
    %c3 = arith.constant 3 : index
    %c0_13 = arith.constant 0 : index
    %11 = vector.load %arg3[%c3, %c0_13] : memref<8x32xf32, #tpu.memory_space<vmem>>, vector<1x32xf32>
    %c4 = arith.constant 4 : index
    %c0_14 = arith.constant 0 : index
    %12 = vector.load %arg3[%c4, %c0_14] : memref<8x32xf32, #tpu.memory_space<vmem>>, vector<1x32xf32>
    %c0_15 = arith.constant 0 : index
    %c0_16 = arith.constant 0 : index
    %13 = vector.load %arg0[%c0_15, %c0_16] : memref<80x16xf32, #tpu.memory_space<vmem>>, vector<80x16xf32>
    %cst = arith.constant dense<0.000000e+00> : vector<80x32xf32>
    %14 = tpu.matmul %13, %0, %cst {dimension_numbers = #tpu.dot_dimension_numbers<[1], [0], [0], [1], [0, 0, 1, 1], [], []>} : vector<80x16xf32>, vector<16x32xf32>, vector<80x32xf32> -> vector<80x32xf32>
    %15 = vector.broadcast %8 : vector<1x32xf32> to vector<80x32xf32>
    %16 = arith.addf %14, %15 : vector<80x32xf32>
    %cst_17 = arith.constant 0.000000e+00 : f32
    %17 = vector.broadcast %cst_17 : f32 to vector<80x32xf32>
    %18 = arith.subf %17, %16 : vector<80x32xf32>
    %19 = math.exp %18 : vector<80x32xf32>
    %cst_18 = arith.constant 1.000000e+00 : f32
    %20 = vector.broadcast %cst_18 : f32 to vector<80x32xf32>
    %21 = arith.addf %20, %19 : vector<80x32xf32>
    %cst_19 = arith.constant 1.000000e+00 : f32
    %22 = vector.broadcast %cst_19 : f32 to vector<80x32xf32>
    %23 = arith.divf %22, %21 : vector<80x32xf32>
    %24 = arith.mulf %16, %23 : vector<80x32xf32>
    %cst_20 = arith.constant dense<0.000000e+00> : vector<80x32xf32>
    %25 = tpu.matmul %24, %1, %cst_20 {dimension_numbers = #tpu.dot_dimension_numbers<[1], [0], [0], [1], [0, 0, 1, 1], [], []>} : vector<80x32xf32>, vector<32x32xf32>, vector<80x32xf32> -> vector<80x32xf32>
    %26 = vector.broadcast %9 : vector<1x32xf32> to vector<80x32xf32>
    %27 = arith.addf %25, %26 : vector<80x32xf32>
    %c0_21 = arith.constant 0 : index
    %c0_22 = arith.constant 0 : index
    %28 = vector.load %arg5[%c0_21, %c0_22] : memref<80x32xf32, #tpu.memory_space<vmem>>, vector<80x32xf32>
    tpu.vector_store %arg5[%c0_21, %c0_22], %27 {strides = array<i32>} : memref<80x32xf32, #tpu.memory_space<vmem>>, vector<80x32xf32>,
    %c0_23 = arith.constant 0 : index
    %c0_24 = arith.constant 0 : index
    %29 = vector.load %arg5[%c0_23, %c0_24] : memref<80x32xf32, #tpu.memory_space<vmem>>, vector<8x32xf32>
    %30 = math.tanh %29 : vector<8x32xf32>
    %cst_25 = arith.constant dense<0.000000e+00> : vector<8x32xf32>
    %31 = tpu.matmul %30, %3, %cst_25 {dimension_numbers = #tpu.dot_dimension_numbers<[1], [0], [0], [1], [0, 0, 1, 1], [], []>} : vector<8x32xf32>, vector<32x32xf32>, vector<8x32xf32> -> vector<8x32xf32>
    %32 = vector.broadcast %10 : vector<1x32xf32> to vector<8x32xf32>
    %33 = arith.addf %31, %32 : vector<8x32xf32>
    %34 = math.tanh %33 : vector<8x32xf32>
    %c8 = arith.constant 8 : index
    %c0_26 = arith.constant 0 : index
    %35 = vector.load %arg5[%c8, %c0_26] : memref<80x32xf32, #tpu.memory_space<vmem>>, vector<8x32xf32>
    %cst_27 = arith.constant dense<0.000000e+00> : vector<8x32xf32>
    %36 = tpu.matmul %30, %2, %cst_27 {dimension_numbers = #tpu.dot_dimension_numbers<[1], [0], [0], [1], [0, 0, 1, 1], [], []>} : vector<8x32xf32>, vector<32x32xf32>, vector<8x32xf32> -> vector<8x32xf32>
    %37 = arith.addf %35, %36 : vector<8x32xf32>
    %38 = math.tanh %37 : vector<8x32xf32>
    %39 = tpu.concatenate %38, %34 in 1 : vector<8x32xf32>, vector<8x32xf32> -> vector<8x64xf32>
    %cst_28 = arith.constant dense<0.000000e+00> : vector<8x32xf32>
    %40 = tpu.matmul %39, %4, %cst_28 {dimension_numbers = #tpu.dot_dimension_numbers<[1], [0], [0], [1], [0, 0, 1, 1], [], []>} : vector<8x64xf32>, vector<64x32xf32>, vector<8x32xf32> -> vector<8x32xf32>
    %41 = vector.broadcast %10 : vector<1x32xf32> to vector<8x32xf32>
    %42 = arith.addf %40, %41 : vector<8x32xf32>
    %43 = math.tanh %42 : vector<8x32xf32>
    %c16_29 = arith.constant 16 : index
    %c0_30 = arith.constant 0 : index
    %44 = vector.load %arg5[%c16_29, %c0_30] : memref<80x32xf32, #tpu.memory_space<vmem>>, vector<8x32xf32>
    %cst_31 = arith.constant dense<0.000000e+00> : vector<8x32xf32>
    %45 = tpu.matmul %38, %2, %cst_31 {dimension_numbers = #tpu.dot_dimension_numbers<[1], [0], [0], [1], [0, 0, 1, 1], [], []>} : vector<8x32xf32>, vector<32x32xf32>, vector<8x32xf32> -> vector<8x32xf32>
    %46 = arith.addf %44, %45 : vector<8x32xf32>
    %47 = math.tanh %46 : vector<8x32xf32>
    %48 = tpu.concatenate %47, %43 in 1 : vector<8x32xf32>, vector<8x32xf32> -> vector<8x64xf32>
    %cst_32 = arith.constant dense<0.000000e+00> : vector<8x32xf32>
    %49 = tpu.matmul %48, %4, %cst_32 {dimension_numbers = #tpu.dot_dimension_numbers<[1], [0], [0], [1], [0, 0, 1, 1], [], []>} : vector<8x64xf32>, vector<64x32xf32>, vector<8x32xf32> -> vector<8x32xf32>
    %50 = vector.broadcast %10 : vector<1x32xf32> to vector<8x32xf32>
    %51 = arith.addf %49, %50 : vector<8x32xf32>
    %52 = math.tanh %51 : vector<8x32xf32>
    %c24 = arith.constant 24 : index
    %c0_33 = arith.constant 0 : index
    %53 = vector.load %arg5[%c24, %c0_33] : memref<80x32xf32, #tpu.memory_space<vmem>>, vector<8x32xf32>
    %cst_34 = arith.constant dense<0.000000e+00> : vector<8x32xf32>
    %54 = tpu.matmul %47, %2, %cst_34 {dimension_numbers = #tpu.dot_dimension_numbers<[1], [0], [0], [1], [0, 0, 1, 1], [], []>} : vector<8x32xf32>, vector<32x32xf32>, vector<8x32xf32> -> vector<8x32xf32>
    %55 = arith.addf %53, %54 : vector<8x32xf32>
    %56 = math.tanh %55 : vector<8x32xf32>
    %57 = tpu.concatenate %56, %52 in 1 : vector<8x32xf32>, vector<8x32xf32> -> vector<8x64xf32>
    %cst_35 = arith.constant dense<0.000000e+00> : vector<8x32xf32>
    %58 = tpu.matmul %57, %4, %cst_35 {dimension_numbers = #tpu.dot_dimension_numbers<[1], [0], [0], [1], [0, 0, 1, 1], [], []>} : vector<8x64xf32>, vector<64x32xf32>, vector<8x32xf32> -> vector<8x32xf32>
    %59 = vector.broadcast %10 : vector<1x32xf32> to vector<8x32xf32>
    %60 = arith.addf %58, %59 : vector<8x32xf32>
    %61 = math.tanh %60 : vector<8x32xf32>
    %c32 = arith.constant 32 : index
    %c0_36 = arith.constant 0 : index
    %62 = vector.load %arg5[%c32, %c0_36] : memref<80x32xf32, #tpu.memory_space<vmem>>, vector<8x32xf32>
    %cst_37 = arith.constant dense<0.000000e+00> : vector<8x32xf32>
    %63 = tpu.matmul %56, %2, %cst_37 {dimension_numbers = #tpu.dot_dimension_numbers<[1], [0], [0], [1], [0, 0, 1, 1], [], []>} : vector<8x32xf32>, vector<32x32xf32>, vector<8x32xf32> -> vector<8x32xf32>
    %64 = arith.addf %62, %63 : vector<8x32xf32>
    %65 = math.tanh %64 : vector<8x32xf32>
    %66 = tpu.concatenate %65, %61 in 1 : vector<8x32xf32>, vector<8x32xf32> -> vector<8x64xf32>
    %cst_38 = arith.constant dense<0.000000e+00> : vector<8x32xf32>
    %67 = tpu.matmul %66, %4, %cst_38 {dimension_numbers = #tpu.dot_dimension_numbers<[1], [0], [0], [1], [0, 0, 1, 1], [], []>} : vector<8x64xf32>, vector<64x32xf32>, vector<8x32xf32> -> vector<8x32xf32>
    %68 = vector.broadcast %10 : vector<1x32xf32> to vector<8x32xf32>
    %69 = arith.addf %67, %68 : vector<8x32xf32>
    %70 = math.tanh %69 : vector<8x32xf32>
    %c40 = arith.constant 40 : index
    %c0_39 = arith.constant 0 : index
    %71 = vector.load %arg5[%c40, %c0_39] : memref<80x32xf32, #tpu.memory_space<vmem>>, vector<8x32xf32>
    %cst_40 = arith.constant dense<0.000000e+00> : vector<8x32xf32>
    %72 = tpu.matmul %65, %2, %cst_40 {dimension_numbers = #tpu.dot_dimension_numbers<[1], [0], [0], [1], [0, 0, 1, 1], [], []>} : vector<8x32xf32>, vector<32x32xf32>, vector<8x32xf32> -> vector<8x32xf32>
    %73 = arith.addf %71, %72 : vector<8x32xf32>
    %74 = math.tanh %73 : vector<8x32xf32>
    %75 = tpu.concatenate %74, %70 in 1 : vector<8x32xf32>, vector<8x32xf32> -> vector<8x64xf32>
    %cst_41 = arith.constant dense<0.000000e+00> : vector<8x32xf32>
    %76 = tpu.matmul %75, %4, %cst_41 {dimension_numbers = #tpu.dot_dimension_numbers<[1], [0], [0], [1], [0, 0, 1, 1], [], []>} : vector<8x64xf32>, vector<64x32xf32>, vector<8x32xf32> -> vector<8x32xf32>
    %77 = vector.broadcast %10 : vector<1x32xf32> to vector<8x32xf32>
    %78 = arith.addf %76, %77 : vector<8x32xf32>
    %79 = math.tanh %78 : vector<8x32xf32>
    %c48_42 = arith.constant 48 : index
    %c0_43 = arith.constant 0 : index
    %80 = vector.load %arg5[%c48_42, %c0_43] : memref<80x32xf32, #tpu.memory_space<vmem>>, vector<8x32xf32>
    %cst_44 = arith.constant dense<0.000000e+00> : vector<8x32xf32>
    %81 = tpu.matmul %74, %2, %cst_44 {dimension_numbers = #tpu.dot_dimension_numbers<[1], [0], [0], [1], [0, 0, 1, 1], [], []>} : vector<8x32xf32>, vector<32x32xf32>, vector<8x32xf32> -> vector<8x32xf32>
    %82 = arith.addf %80, %81 : vector<8x32xf32>
    %83 = math.tanh %82 : vector<8x32xf32>
    %84 = tpu.concatenate %83, %79 in 1 : vector<8x32xf32>, vector<8x32xf32> -> vector<8x64xf32>
    %cst_45 = arith.constant dense<0.000000e+00> : vector<8x32xf32>
    %85 = tpu.matmul %84, %4, %cst_45 {dimension_numbers = #tpu.dot_dimension_numbers<[1], [0], [0], [1], [0, 0, 1, 1], [], []>} : vector<8x64xf32>, vector<64x32xf32>, vector<8x32xf32> -> vector<8x32xf32>
    %86 = vector.broadcast %10 : vector<1x32xf32> to vector<8x32xf32>
    %87 = arith.addf %85, %86 : vector<8x32xf32>
    %88 = math.tanh %87 : vector<8x32xf32>
    %c56 = arith.constant 56 : index
    %c0_46 = arith.constant 0 : index
    %89 = vector.load %arg5[%c56, %c0_46] : memref<80x32xf32, #tpu.memory_space<vmem>>, vector<8x32xf32>
    %cst_47 = arith.constant dense<0.000000e+00> : vector<8x32xf32>
    %90 = tpu.matmul %83, %2, %cst_47 {dimension_numbers = #tpu.dot_dimension_numbers<[1], [0], [0], [1], [0, 0, 1, 1], [], []>} : vector<8x32xf32>, vector<32x32xf32>, vector<8x32xf32> -> vector<8x32xf32>
    %91 = arith.addf %89, %90 : vector<8x32xf32>
    %92 = math.tanh %91 : vector<8x32xf32>
    %93 = tpu.concatenate %92, %88 in 1 : vector<8x32xf32>, vector<8x32xf32> -> vector<8x64xf32>
    %cst_48 = arith.constant dense<0.000000e+00> : vector<8x32xf32>
    %94 = tpu.matmul %93, %4, %cst_48 {dimension_numbers = #tpu.dot_dimension_numbers<[1], [0], [0], [1], [0, 0, 1, 1], [], []>} : vector<8x64xf32>, vector<64x32xf32>, vector<8x32xf32> -> vector<8x32xf32>
    %95 = vector.broadcast %10 : vector<1x32xf32> to vector<8x32xf32>
    %96 = arith.addf %94, %95 : vector<8x32xf32>
    %97 = math.tanh %96 : vector<8x32xf32>
    %c64 = arith.constant 64 : index
    %c0_49 = arith.constant 0 : index
    %98 = vector.load %arg5[%c64, %c0_49] : memref<80x32xf32, #tpu.memory_space<vmem>>, vector<8x32xf32>
    %cst_50 = arith.constant dense<0.000000e+00> : vector<8x32xf32>
    %99 = tpu.matmul %92, %2, %cst_50 {dimension_numbers = #tpu.dot_dimension_numbers<[1], [0], [0], [1], [0, 0, 1, 1], [], []>} : vector<8x32xf32>, vector<32x32xf32>, vector<8x32xf32> -> vector<8x32xf32>
    %100 = arith.addf %98, %99 : vector<8x32xf32>
    %101 = math.tanh %100 : vector<8x32xf32>
    %102 = tpu.concatenate %101, %97 in 1 : vector<8x32xf32>, vector<8x32xf32> -> vector<8x64xf32>
    %cst_51 = arith.constant dense<0.000000e+00> : vector<8x32xf32>
    %103 = tpu.matmul %102, %4, %cst_51 {dimension_numbers = #tpu.dot_dimension_numbers<[1], [0], [0], [1], [0, 0, 1, 1], [], []>} : vector<8x64xf32>, vector<64x32xf32>, vector<8x32xf32> -> vector<8x32xf32>
    %104 = vector.broadcast %10 : vector<1x32xf32> to vector<8x32xf32>
    %105 = arith.addf %103, %104 : vector<8x32xf32>
    %106 = math.tanh %105 : vector<8x32xf32>
    %c72 = arith.constant 72 : index
    %c0_52 = arith.constant 0 : index
    %107 = vector.load %arg5[%c72, %c0_52] : memref<80x32xf32, #tpu.memory_space<vmem>>, vector<8x32xf32>
    %cst_53 = arith.constant dense<0.000000e+00> : vector<8x32xf32>
    %108 = tpu.matmul %101, %2, %cst_53 {dimension_numbers = #tpu.dot_dimension_numbers<[1], [0], [0], [1], [0, 0, 1, 1], [], []>} : vector<8x32xf32>, vector<32x32xf32>, vector<8x32xf32> -> vector<8x32xf32>
    %109 = arith.addf %107, %108 : vector<8x32xf32>
    %110 = math.tanh %109 : vector<8x32xf32>
    %111 = tpu.concatenate %110, %106 in 1 : vector<8x32xf32>, vector<8x32xf32> -> vector<8x64xf32>
    %cst_54 = arith.constant dense<0.000000e+00> : vector<8x32xf32>
    %112 = tpu.matmul %111, %4, %cst_54 {dimension_numbers = #tpu.dot_dimension_numbers<[1], [0], [0], [1], [0, 0, 1, 1], [], []>} : vector<8x64xf32>, vector<64x32xf32>, vector<8x32xf32> -> vector<8x32xf32>
    %113 = vector.broadcast %10 : vector<1x32xf32> to vector<8x32xf32>
    %114 = arith.addf %112, %113 : vector<8x32xf32>
    %115 = math.tanh %114 : vector<8x32xf32>
    %cst_55 = arith.constant dense<0.000000e+00> : vector<8x32xf32>
    %116 = tpu.matmul %115, %5, %cst_55 {dimension_numbers = #tpu.dot_dimension_numbers<[1], [0], [0], [1], [0, 0, 1, 1], [], []>} : vector<8x32xf32>, vector<32x32xf32>, vector<8x32xf32> -> vector<8x32xf32>
    %c0_56 = arith.constant 0 : index
    %c0_57 = arith.constant 0 : index
    %117 = vector.load %arg1[%c0_56, %c0_57] : memref<8x32xf32, #tpu.memory_space<vmem>>, vector<8x32xf32>
    %cst_58 = arith.constant dense<0.000000e+00> : vector<8x32xf32>
    %118 = tpu.matmul %117, %6, %cst_58 {dimension_numbers = #tpu.dot_dimension_numbers<[1], [0], [0], [1], [0, 0, 1, 1], [], []>} : vector<8x32xf32>, vector<32x32xf32>, vector<8x32xf32> -> vector<8x32xf32>
    %119 = arith.addf %116, %118 : vector<8x32xf32>
    %120 = vector.broadcast %11 : vector<1x32xf32> to vector<8x32xf32>
    %121 = arith.addf %119, %120 : vector<8x32xf32>
    %cst_59 = arith.constant 0.000000e+00 : f32
    %122 = vector.broadcast %cst_59 : f32 to vector<8x32xf32>
    %123 = arith.subf %122, %121 : vector<8x32xf32>
    %124 = math.exp %123 : vector<8x32xf32>
    %cst_60 = arith.constant 1.000000e+00 : f32
    %125 = vector.broadcast %cst_60 : f32 to vector<8x32xf32>
    %126 = arith.addf %125, %124 : vector<8x32xf32>
    %cst_61 = arith.constant 1.000000e+00 : f32
    %127 = vector.broadcast %cst_61 : f32 to vector<8x32xf32>
    %128 = arith.divf %127, %126 : vector<8x32xf32>
    %129 = arith.mulf %121, %128 : vector<8x32xf32>
    %cst_62 = arith.constant dense<0.000000e+00> : vector<8x32xf32>
    %130 = tpu.matmul %129, %7, %cst_62 {dimension_numbers = #tpu.dot_dimension_numbers<[1], [0], [0], [1], [0, 0, 1, 1], [], []>} : vector<8x32xf32>, vector<32x32xf32>, vector<8x32xf32> -> vector<8x32xf32>
    %131 = vector.broadcast %12 : vector<1x32xf32> to vector<8x32xf32>
    %132 = arith.addf %130, %131 : vector<8x32xf32>
    %133 = vector.extract_strided_slice %132 {offsets = [0, 0], sizes = [8, 1], strides = [1, 1]} : vector<8x32xf32> to vector<8x1xf32>
    %c0_63 = arith.constant 0 : index
    %c0_64 = arith.constant 0 : index
    %134 = vector.load %arg4[%c0_63, %c0_64] : memref<8x1xf32, #tpu.memory_space<vmem>>, vector<8x1xf32>
    tpu.vector_store %arg4[%c0_63, %c0_64], %133 {strides = array<i32>} : memref<8x1xf32, #tpu.memory_space<vmem>>, vector<8x1xf32>,
    return
  }
}

</mosaic_0001>

<llo_original>
// kernel: tpu_custom_call.1
$region0: #{tpu_custom_call.1}
  #allocation0 [shape = 'u32[]', space=smem, size = 0x4, offset = 0x4, fixed_abs, tag = 'smem constant byte address 0x4 - core index']
  #allocation1 [shape = 'u32[144,128]{1,0:T(1,128)}', space=vmem, size = 0x12000, scoped, tag = 'internal scratch']
  #allocation2 [shape = 'f32[80,32]{1,0:T(8,128)}', space=vmem, size = 0xa000, scoped, tag = 'scratch operand']
  %s0 = inlined_call_operand.vmem [shape: f32[80,16], index: 0, kind: input, shape index: {}]
  %s1 = inlined_call_operand.vmem [shape: f32[8,32], index: 1, kind: input, shape index: {}]
  %s2 = inlined_call_operand.vmem [shape: f32[240,32], index: 2, kind: input, shape index: {}]
  %s3 = inlined_call_operand.vmem [shape: f32[8,32], index: 3, kind: input, shape index: {}]
  %s4 = inlined_call_operand.vmem [shape: f32[8,1], index: 4, kind: output, shape index: {}]
  %s5 = sld [smem:[#allocation0]]
  $region26: #{tpu_custom_call.1} parent=0
    _
  %s7 = ssub.s32 1, %s5
  %s8 = scalar_select 0, %s7, %s5
  // Predicated region
  $region2: #{tpu_custom_call.1} parent=0 // pred_check
    _
  $region3: #{tpu_custom_call.1} parent=0 // pred_check_branch
    %10 = sbr.rel (0) target = $region5
  $region4: #{tpu_custom_call.1} parent=0 // pred_region
    _
  $region5: #{tpu_custom_call.1} parent=0 // pred_fallthru
    _
  // Predicated region
  $region6: #{tpu_custom_call.1} parent=0 // pred_check
    _
  $region7: #{tpu_custom_call.1} parent=0 // pred_check_branch
    %12 = sbr.rel (0) target = $region9
  $region8: #{tpu_custom_call.1} parent=0 // pred_region
    _
  $region9: #{tpu_custom_call.1} parent=0 // pred_fallthru
    _
  // Predicated region
  $region10: #{tpu_custom_call.1} parent=0 // pred_check
    _
  $region11: #{tpu_custom_call.1} parent=0 // pred_check_branch
    %14 = sbr.rel (0) target = $region13
  $region12: #{tpu_custom_call.1} parent=0 // pred_region
    _
  $region13: #{tpu_custom_call.1} parent=0 // pred_fallthru
    _
  // Predicated region
  $region14: #{tpu_custom_call.1} parent=0 // pred_check
    _
  $region15: #{tpu_custom_call.1} parent=0 // pred_check_branch
    %16 = sbr.rel (0) target = $region17
  $region16: #{tpu_custom_call.1} parent=0 // pred_region
    _
  $region17: #{tpu_custom_call.1} parent=0 // pred_fallthru
    _
  %v17 = vld [vmem:[%s2] sm:$0xff]
  %v18 = vld [vmem:[%s2 + $0x8] sm:$0xff]
  %v19 = vld [vmem:[%s2 + $0x10] sm:$0xff]
  %v20 = vld [vmem:[%s2 + $0x18] sm:$0xff]
  %v21 = vld [vmem:[%s2 + $0x20] sm:$0xff]
  %v22 = vld [vmem:[%s2 + $0x28] sm:$0xff]
  %v23 = vld [vmem:[%s2 + $0x30] sm:$0xff]
  %v24 = vld [vmem:[%s2 + $0x38] sm:$0xff]
  %v25 = vld [vmem:[%s2 + $0x40] sm:$0xff]
  %v26 = vld [vmem:[%s2 + $0x48] sm:$0xff]
  %v27 = vld [vmem:[%s2 + $0x50] sm:$0xff]
  %v28 = vld [vmem:[%s2 + $0x58] sm:$0xff]
  %v29 = vld [vmem:[%s2 + $0x60] sm:$0xff]
  %v30 = vld [vmem:[%s2 + $0x68] sm:$0xff]
  %v31 = vld [vmem:[%s2 + $0x70] sm:$0xff]
  %v32 = vld [vmem:[%s2 + $0x78] sm:$0xff]
  %v33 = vld [vmem:[%s2 + $0x80] sm:$0xff]
  %v34 = vld [vmem:[%s2 + $0x88] sm:$0xff]
  %v35 = vld [vmem:[%s2 + $0x90] sm:$0xff]
  %v36 = vld [vmem:[%s2 + $0x98] sm:$0xff]
  %v37 = vld [vmem:[%s2 + $0xa0] sm:$0xff]
  %v38 = vld [vmem:[%s2 + $0xa8] sm:$0xff]
  %v39 = vld [vmem:[%s2 + $0xb0] sm:$0xff]
  %v40 = vld [vmem:[%s2 + $0xb8] sm:$0xff]
  %v41 = vld [vmem:[%s2 + $0xc0] sm:$0xff]
  %v42 = vld [vmem:[%s2 + $0xc8] sm:$0xff]
  %v43 = vld [vmem:[%s2 + $0xd0] sm:$0xff]
  %v44 = vld [vmem:[%s2 + $0xd8] sm:$0xff]
  %v45 = vld [vmem:[%s2 + $0xe0] sm:$0xff]
  %v46 = vld [vmem:[%s2 + $0xe8] sm:$0xff]
  %v47 = vld [vmem:[%s3] sm:$0x1]
  %v48 = vld [vmem:[%s3 + $0x1] sm:$0x1]
  %v49 = vld [vmem:[%s3 + $0x2] sm:$0x1]
  %v50 = vld [vmem:[%s3 + $0x3] sm:$0x1]
  %v51 = vld [vmem:[%s3 + $0x4] sm:$0x1]
  %v52 = vld [vmem:[%s0] sm:$0xff]
  %v53 = vld [vmem:[%s0 + $0x8] sm:$0xff]
  %v54 = vld [vmem:[%s0 + $0x10] sm:$0xff]
  %v55 = vld [vmem:[%s0 + $0x18] sm:$0xff]
  %v56 = vld [vmem:[%s0 + $0x20] sm:$0xff]
  %v57 = vld [vmem:[%s0 + $0x28] sm:$0xff]
  %v58 = vld [vmem:[%s0 + $0x30] sm:$0xff]
  %v59 = vld [vmem:[%s0 + $0x38] sm:$0xff]
  %v60 = vld [vmem:[%s0 + $0x40] sm:$0xff]
  %v61 = vld [vmem:[%s0 + $0x48] sm:$0xff]
  %v62 = vlaneseq
  %v63 = vshrl.u32 %v62, 7
  %v64 = vsub.s32 0, %v63
  %v65 = vrot.slane %v47, %v64
  %vm66 = vcmask 130048
  %v68 = vsel %vm66, %v52, 0
  %v71 = vsel %vm66, %v53, 0
  %v74 = vsel %vm66, %v54, 0
  %v77 = vsel %vm66, %v55, 0
  %v80 = vsel %vm66, %v56, 0
  %v83 = vsel %vm66, %v57, 0
  %v86 = vsel %vm66, %v58, 0
  %v89 = vsel %vm66, %v59, 0
  %v92 = vsel %vm66, %v60, 0
  %v95 = vsel %vm66, %v61, 0
  %97 = vmatprep.subr.mxu0 0.0
  %98 = vmatpush1.msra.mxu0 %v17
  %99 = vmatprep.subr.mxu0 0.0
  %100 = vmatpush1.msra.mxu0 %v18
  %101 = vmatprep.subr.mxu0 0.0
  %102 = vmatpush1.msra.mxu0 0.0
  %103 = vmatprep.subr.mxu0 0.0
  %104 = vmatpush1.msra.mxu0 0.0
  %105 = vmatprep.subr.mxu0 0.0
  %106 = vmatpush1.msra.mxu0 0.0
  %107 = vmatprep.subr.mxu0 0.0
  %108 = vmatpush1.msra.mxu0 0.0
  %109 = vmatprep.subr.mxu0 0.0
  %110 = vmatpush1.msra.mxu0 0.0
  %111 = vmatprep.subr.mxu0 0.0
  %112 = vmatpush1.msra.mxu0 0.0
  %113 = vmatprep.subr.mxu0 0.0
  %114 = vmatpush1.msra.mxu0 0.0
  %115 = vmatprep.subr.mxu0 0.0
  %116 = vmatpush1.msra.mxu0 0.0
  %117 = vmatprep.subr.mxu0 0.0
  %118 = vmatpush1.msra.mxu0 0.0
  %119 = vmatprep.subr.mxu0 0.0
  %120 = vmatpush1.msra.mxu0 0.0
  %121 = vmatprep.subr.mxu0 0.0
  %122 = vmatpush1.msra.mxu0 0.0
  %123 = vmatprep.subr.mxu0 0.0
  %124 = vmatpush1.msra.mxu0 0.0
  %125 = vmatprep.subr.mxu0 0.0
  %126 = vmatpush1.msra.mxu0 0.0
  %127 = vmatprep.subr.mxu0 0.0
  %128 = vmatpush1.msra.mxu0 0.0
  %129 = vmatprep.subr.mxu0 0.0
  %130 = vmatpush1.msra.mxu0 0.0
  %131 = vmatprep.subr.mxu0 0.0
  %132 = vmatpush1.msra.mxu0 0.0
  %133 = vmatprep.subr.mxu0 0.0
  %134 = vmatpush1.msra.mxu0 0.0
  %135 = vmatprep.subr.mxu0 0.0
  %136 = vmatpush1.msra.mxu0 0.0
  %137 = vmatprep.subr.mxu0 0.0
  %138 = vmatpush1.msra.mxu0 0.0
  %139 = vmatprep.subr.mxu0 0.0
  %140 = vmatpush1.msra.mxu0 0.0
  %141 = vmatprep.subr.mxu0 0.0
  %142 = vmatpush1.msra.mxu0 0.0
  %143 = vmatprep.subr.mxu0 0.0
  %144 = vmatpush1.msra.mxu0 0.0
  %145 = vmatprep.subr.mxu0 0.0
  %146 = vmatpush1.msra.mxu0 0.0
  %147 = vmatprep.subr.mxu0 0.0
  %148 = vmatpush1.msra.mxu0 0.0
  %149 = vmatprep.subr.mxu0 0.0
  %150 = vmatpush1.msra.mxu0 0.0
  %151 = vmatprep.subr.mxu0 0.0
  %152 = vmatpush1.msra.mxu0 0.0
  %153 = vmatprep.subr.mxu0 0.0
  %154 = vmatpush1.msra.mxu0 0.0
  %155 = vmatprep.subr.mxu0 0.0
  %156 = vmatpush1.msra.mxu0 0.0
  %157 = vmatprep.subr.mxu0 0.0
  %158 = vmatpush1.msra.mxu0 0.0
  %159 = vmatprep.subr.mxu0 0.0
  %160 = vmatpush1.msra.mxu0 0.0
  %161 = vmatprep.mubr.f32.mxu0 0.0
  %162 = vmatmul.mubr.f32.gmra.mrb[0].mxu0 %v68
  %v163 = vpop.f32.mrb[0].mxu0
  %v164 = vadd.f32 %v65, %v163
  %v165 = vpop.f32.mrb[0].mxu0
  %166 = vmatprep.mubr.f32.mxu0 0.0
  %167 = vmatmul.mubr.f32.gmra.mrb[0].mxu0 %v71
  %v168 = vpop.f32.mrb[0].mxu0
  %v169 = vadd.f32 %v65, %v168
  %v170 = vpop.f32.mrb[0].mxu0
  %171 = vmatprep.mubr.f32.mxu0 0.0
  %172 = vmatmul.mubr.f32.gmra.mrb[0].mxu0 %v74
  %v173 = vpop.f32.mrb[0].mxu0
  %v174 = vadd.f32 %v65, %v173
  %v175 = vpop.f32.mrb[0].mxu0
  %176 = vmatprep.mubr.f32.mxu0 0.0
  %177 = vmatmul.mubr.f32.gmra.mrb[0].mxu0 %v77
  %v178 = vpop.f32.mrb[0].mxu0
  %v179 = vadd.f32 %v65, %v178
  %v180 = vpop.f32.mrb[0].mxu0
  %181 = vmatprep.mubr.f32.mxu0 0.0
  %182 = vmatmul.mubr.f32.gmra.mrb[0].mxu0 %v80
  %v183 = vpop.f32.mrb[0].mxu0
  %v184 = vadd.f32 %v65, %v183
  %v185 = vpop.f32.mrb[0].mxu0
  %186 = vmatprep.mubr.f32.mxu0 0.0
  %187 = vmatmul.mubr.f32.gmra.mrb[0].mxu0 %v83
  %v188 = vpop.f32.mrb[0].mxu0
  %v189 = vadd.f32 %v65, %v188
  %v190 = vpop.f32.mrb[0].mxu0
  %191 = vmatprep.mubr.f32.mxu0 0.0
  %192 = vmatmul.mubr.f32.gmra.mrb[0].mxu0 %v86
  %v193 = vpop.f32.mrb[0].mxu0
  %v194 = vadd.f32 %v65, %v193
  %v195 = vpop.f32.mrb[0].mxu0
  %196 = vmatprep.mubr.f32.mxu0 0.0
  %197 = vmatmul.mubr.f32.gmra.mrb[0].mxu0 %v89
  %v198 = vpop.f32.mrb[0].mxu0
  %v199 = vadd.f32 %v65, %v198
  %v200 = vpop.f32.mrb[0].mxu0
  %201 = vmatprep.mubr.f32.mxu0 0.0
  %202 = vmatmul.mubr.f32.gmra.mrb[0].mxu0 %v92
  %v203 = vpop.f32.mrb[0].mxu0
  %v204 = vadd.f32 %v65, %v203
  %v205 = vpop.f32.mrb[0].mxu0
  %206 = vmatprep.mubr.f32.mxu0 0.0
  %207 = vmatmul.mubr.f32.gmra.mrb[0].mxu0 %v95
  %v208 = vpop.f32.mrb[0].mxu0
  %v209 = vadd.f32 %v65, %v208
  %v210 = vpop.f32.mrb[0].mxu0
  %211 = vdwg.mxu0
  %v212 = vsub.f32 0.0, %v164
  %v213 = vsub.f32 0.0, %v169
  %v214 = vsub.f32 0.0, %v174
  %v215 = vsub.f32 0.0, %v179
  %v216 = vsub.f32 0.0, %v184
  %v217 = vsub.f32 0.0, %v189
  %v218 = vsub.f32 0.0, %v194
  %v219 = vsub.f32 0.0, %v199
  %v220 = vsub.f32 0.0, %v204
  %v221 = vsub.f32 0.0, %v209
  %v222 = vmul.f32 %v212, 1.442695
  %v223 = vpow.pop %v222
  %v224 = vmul.f32 %v213, 1.442695
  %v225 = vpow.pop %v224
  %v226 = vmul.f32 %v214, 1.442695
  %v227 = vpow.pop %v226
  %v228 = vmul.f32 %v215, 1.442695
  %v229 = vpow.pop %v228
  %v230 = vmul.f32 %v216, 1.442695
  %v231 = vpow.pop %v230
  %v232 = vmul.f32 %v217, 1.442695
  %v233 = vpow.pop %v232
  %v234 = vmul.f32 %v218, 1.442695
  %v235 = vpow.pop %v234
  %v236 = vmul.f32 %v219, 1.442695
  %v237 = vpow.pop %v236
  %v238 = vmul.f32 %v220, 1.442695
  %v239 = vpow.pop %v238
  %v240 = vmul.f32 %v221, 1.442695
  %v241 = vpow.pop %v240
  %v242 = vadd.f32 %v223, 1.0
  %v243 = vadd.f32 %v225, 1.0
  %v244 = vadd.f32 %v227, 1.0
  %v245 = vadd.f32 %v229, 1.0
  %v246 = vadd.f32 %v231, 1.0
  %v247 = vadd.f32 %v233, 1.0
  %v248 = vadd.f32 %v235, 1.0
  %v249 = vadd.f32 %v237, 1.0
  %v250 = vadd.f32 %v239, 1.0
  %v251 = vadd.f32 %v241, 1.0
  %v252 = vrcp.pop %v242
  %v253 = vmul.f32 1.0, %v252
  %v254 = vrcp.pop %v243
  %v255 = vmul.f32 1.0, %v254
  %v256 = vrcp.pop %v244
  %v257 = vmul.f32 1.0, %v256
  %v258 = vrcp.pop %v245
  %v259 = vmul.f32 1.0, %v258
  %v260 = vrcp.pop %v246
  %v261 = vmul.f32 1.0, %v260
  %v262 = vrcp.pop %v247
  %v263 = vmul.f32 1.0, %v262
  %v264 = vrcp.pop %v248
  %v265 = vmul.f32 1.0, %v264
  %v266 = vrcp.pop %v249
  %v267 = vmul.f32 1.0, %v266
  %v268 = vrcp.pop %v250
  %v269 = vmul.f32 1.0, %v268
  %v270 = vrcp.pop %v251
  %v271 = vmul.f32 1.0, %v270
  %v272 = vmul.f32 %v164, %v253
  %v273 = vmul.f32 %v169, %v255
  %v274 = vmul.f32 %v174, %v257
  %v275 = vmul.f32 %v179, %v259
  %v276 = vmul.f32 %v184, %v261
  %v277 = vmul.f32 %v189, %v263
  %v278 = vmul.f32 %v194, %v265
  %v279 = vmul.f32 %v199, %v267
  %v280 = vmul.f32 %v204, %v269
  %v281 = vmul.f32 %v209, %v271
  %v282 = vlaneseq
  %v283 = vshrl.u32 %v282, 7
  %v284 = vsub.s32 0, %v283
  %v285 = vrot.slane %v48, %v284
  %vm286 = vcmask 261120
  %v288 = vsel %vm286, %v272, 0
  %v291 = vsel %vm286, %v273, 0
  %v294 = vsel %vm286, %v274, 0
  %v297 = vsel %vm286, %v275, 0
  %v300 = vsel %vm286, %v276, 0
  %v303 = vsel %vm286, %v277, 0
  %v306 = vsel %vm286, %v278, 0
  %v309 = vsel %vm286, %v279, 0
  %v312 = vsel %vm286, %v280, 0
  %v315 = vsel %vm286, %v281, 0
  %317 = vmatprep.subr.mxu0 0.0
  %318 = vmatpush1.msra.mxu0 %v19
  %319 = vmatprep.subr.mxu0 0.0
  %320 = vmatpush1.msra.mxu0 %v20
  %321 = vmatprep.subr.mxu0 0.0
  %322 = vmatpush1.msra.mxu0 %v21
  %323 = vmatprep.subr.mxu0 0.0
  %324 = vmatpush1.msra.mxu0 %v22
  %325 = vmatprep.subr.mxu0 0.0
  %326 = vmatpush1.msra.mxu0 0.0
  %327 = vmatprep.subr.mxu0 0.0
  %328 = vmatpush1.msra.mxu0 0.0
  %329 = vmatprep.subr.mxu0 0.0
  %330 = vmatpush1.msra.mxu0 0.0
  %331 = vmatprep.subr.mxu0 0.0
  %332 = vmatpush1.msra.mxu0 0.0
  %333 = vmatprep.subr.mxu0 0.0
  %334 = vmatpush1.msra.mxu0 0.0
  %335 = vmatprep.subr.mxu0 0.0
  %336 = vmatpush1.msra.mxu0 0.0
  %337 = vmatprep.subr.mxu0 0.0
  %338 = vmatpush1.msra.mxu0 0.0
  %339 = vmatprep.subr.mxu0 0.0
  %340 = vmatpush1.msra.mxu0 0.0
  %341 = vmatprep.subr.mxu0 0.0
  %342 = vmatpush1.msra.mxu0 0.0
  %343 = vmatprep.subr.mxu0 0.0
  %344 = vmatpush1.msra.mxu0 0.0
  %345 = vmatprep.subr.mxu0 0.0
  %346 = vmatpush1.msra.mxu0 0.0
  %347 = vmatprep.subr.mxu0 0.0
  %348 = vmatpush1.msra.mxu0 0.0
  %349 = vmatprep.subr.mxu0 0.0
  %350 = vmatpush1.msra.mxu0 0.0
  %351 = vmatprep.subr.mxu0 0.0
  %352 = vmatpush1.msra.mxu0 0.0
  %353 = vmatprep.subr.mxu0 0.0
  %354 = vmatpush1.msra.mxu0 0.0
  %355 = vmatprep.subr.mxu0 0.0
  %356 = vmatpush1.msra.mxu0 0.0
  %357 = vmatprep.subr.mxu0 0.0
  %358 = vmatpush1.msra.mxu0 0.0
  %359 = vmatprep.subr.mxu0 0.0
  %360 = vmatpush1.msra.mxu0 0.0
  %361 = vmatprep.subr.mxu0 0.0
  %362 = vmatpush1.msra.mxu0 0.0
  %363 = vmatprep.subr.mxu0 0.0
  %364 = vmatpush1.msra.mxu0 0.0
  %365 = vmatprep.subr.mxu0 0.0
  %366 = vmatpush1.msra.mxu0 0.0
  %367 = vmatprep.subr.mxu0 0.0
  %368 = vmatpush1.msra.mxu0 0.0
  %369 = vmatprep.subr.mxu0 0.0
  %370 = vmatpush1.msra.mxu0 0.0
  %371 = vmatprep.subr.mxu0 0.0
  %372 = vmatpush1.msra.mxu0 0.0
  %373 = vmatprep.subr.mxu0 0.0
  %374 = vmatpush1.msra.mxu0 0.0
  %375 = vmatprep.subr.mxu0 0.0
  %376 = vmatpush1.msra.mxu0 0.0
  %377 = vmatprep.subr.mxu0 0.0
  %378 = vmatpush1.msra.mxu0 0.0
  %379 = vmatprep.subr.mxu0 0.0
  %380 = vmatpush1.msra.mxu0 0.0
  %381 = vmatprep.mubr.f32.mxu0 0.0
  %382 = vmatmul.mubr.f32.gmra.mrb[0].mxu0 %v288
  %v383 = vpop.f32.mrb[0].mxu0
  %v384 = vadd.f32 %v285, %v383
  %v385 = vpop.f32.mrb[0].mxu0
  %386 = vmatprep.mubr.f32.mxu0 0.0
  %387 = vmatmul.mubr.f32.gmra.mrb[0].mxu0 %v291
  %v388 = vpop.f32.mrb[0].mxu0
  %v389 = vadd.f32 %v285, %v388
  %v390 = vpop.f32.mrb[0].mxu0
  %391 = vmatprep.mubr.f32.mxu0 0.0
  %392 = vmatmul.mubr.f32.gmra.mrb[0].mxu0 %v294
  %v393 = vpop.f32.mrb[0].mxu0
  %v394 = vadd.f32 %v285, %v393
  %v395 = vpop.f32.mrb[0].mxu0
  %396 = vmatprep.mubr.f32.mxu0 0.0
  %397 = vmatmul.mubr.f32.gmra.mrb[0].mxu0 %v297
  %v398 = vpop.f32.mrb[0].mxu0
  %v399 = vadd.f32 %v285, %v398
  %v400 = vpop.f32.mrb[0].mxu0
  %401 = vmatprep.mubr.f32.mxu0 0.0
  %402 = vmatmul.mubr.f32.gmra.mrb[0].mxu0 %v300
  %v403 = vpop.f32.mrb[0].mxu0
  %v404 = vadd.f32 %v285, %v403
  %v405 = vpop.f32.mrb[0].mxu0
  %406 = vmatprep.mubr.f32.mxu0 0.0
  %407 = vmatmul.mubr.f32.gmra.mrb[0].mxu0 %v303
  %v408 = vpop.f32.mrb[0].mxu0
  %v409 = vadd.f32 %v285, %v408
  %v410 = vpop.f32.mrb[0].mxu0
  %411 = vmatprep.mubr.f32.mxu0 0.0
  %412 = vmatmul.mubr.f32.gmra.mrb[0].mxu0 %v306
  %v413 = vpop.f32.mrb[0].mxu0
  %v414 = vadd.f32 %v285, %v413
  %v415 = vpop.f32.mrb[0].mxu0
  %416 = vmatprep.mubr.f32.mxu0 0.0
  %417 = vmatmul.mubr.f32.gmra.mrb[0].mxu0 %v309
  %v418 = vpop.f32.mrb[0].mxu0
  %v419 = vadd.f32 %v285, %v418
  %v420 = vpop.f32.mrb[0].mxu0
  %421 = vmatprep.mubr.f32.mxu0 0.0
  %422 = vmatmul.mubr.f32.gmra.mrb[0].mxu0 %v312
  %v423 = vpop.f32.mrb[0].mxu0
  %v424 = vadd.f32 %v285, %v423
  %v425 = vpop.f32.mrb[0].mxu0
  %426 = vmatprep.mubr.f32.mxu0 0.0
  %427 = vmatmul.mubr.f32.gmra.mrb[0].mxu0 %v315
  %v428 = vpop.f32.mrb[0].mxu0
  %v429 = vadd.f32 %v285, %v428
  %v430 = vpop.f32.mrb[0].mxu0
  %431 = vdwg.mxu0
  %432 = vst.msk [vmem:[#allocation2] sm:$0xff] %vm286, %v384
  %433 = vst.msk [vmem:[#allocation2 + $0x8] sm:$0xff] %vm286, %v389
  %434 = vst.msk [vmem:[#allocation2 + $0x10] sm:$0xff] %vm286, %v394
  %435 = vst.msk [vmem:[#allocation2 + $0x18] sm:$0xff] %vm286, %v399
  %436 = vst.msk [vmem:[#allocation2 + $0x20] sm:$0xff] %vm286, %v404
  %437 = vst.msk [vmem:[#allocation2 + $0x28] sm:$0xff] %vm286, %v409
  %438 = vst.msk [vmem:[#allocation2 + $0x30] sm:$0xff] %vm286, %v414
  %439 = vst.msk [vmem:[#allocation2 + $0x38] sm:$0xff] %vm286, %v419
  %440 = vst.msk [vmem:[#allocation2 + $0x40] sm:$0xff] %vm286, %v424
  %441 = vst.msk [vmem:[#allocation2 + $0x48] sm:$0xff] %vm286, %v429
  %v442 = vld [vmem:[#allocation2] sm:$0xff]
  %v443 = vtanh.pop %v442
  %v444 = vlaneseq
  %v445 = vshrl.u32 %v444, 7
  %v446 = vsub.s32 0, %v445
  %v447 = vrot.slane %v49, %v446
  %v449 = vsel %vm286, %v443, 0
  %451 = vmatprep.subr.mxu0 0.0
  %452 = vmatpush1.msra.mxu0 %v27
  %453 = vmatprep.subr.mxu0 0.0
  %454 = vmatpush1.msra.mxu0 %v28
  %455 = vmatprep.subr.mxu0 0.0
  %456 = vmatpush1.msra.mxu0 %v29
  %457 = vmatprep.subr.mxu0 0.0
  %458 = vmatpush1.msra.mxu0 %v30
  %459 = vmatprep.subr.mxu0 0.0
  %460 = vmatpush1.msra.mxu0 0.0
  %461 = vmatprep.subr.mxu0 0.0
  %462 = vmatpush1.msra.mxu0 0.0
  %463 = vmatprep.subr.mxu0 0.0
  %464 = vmatpush1.msra.mxu0 0.0
  %465 = vmatprep.subr.mxu0 0.0
  %466 = vmatpush1.msra.mxu0 0.0
  %467 = vmatprep.subr.mxu0 0.0
  %468 = vmatpush1.msra.mxu0 0.0
  %469 = vmatprep.subr.mxu0 0.0
  %470 = vmatpush1.msra.mxu0 0.0
  %471 = vmatprep.subr.mxu0 0.0
  %472 = vmatpush1.msra.mxu0 0.0
  %473 = vmatprep.subr.mxu0 0.0
  %474 = vmatpush1.msra.mxu0 0.0
  %475 = vmatprep.subr.mxu0 0.0
  %476 = vmatpush1.msra.mxu0 0.0
  %477 = vmatprep.subr.mxu0 0.0
  %478 = vmatpush1.msra.mxu0 0.0
  %479 = vmatprep.subr.mxu0 0.0
  %480 = vmatpush1.msra.mxu0 0.0
  %481 = vmatprep.subr.mxu0 0.0
  %482 = vmatpush1.msra.mxu0 0.0
  %483 = vmatprep.subr.mxu0 0.0
  %484 = vmatpush1.msra.mxu0 0.0
  %485 = vmatprep.subr.mxu0 0.0
  %486 = vmatpush1.msra.mxu0 0.0
  %487 = vmatprep.subr.mxu0 0.0
  %488 = vmatpush1.msra.mxu0 0.0
  %489 = vmatprep.subr.mxu0 0.0
  %490 = vmatpush1.msra.mxu0 0.0
  %491 = vmatprep.subr.mxu0 0.0
  %492 = vmatpush1.msra.mxu0 0.0
  %493 = vmatprep.subr.mxu0 0.0
  %494 = vmatpush1.msra.mxu0 0.0
  %495 = vmatprep.subr.mxu0 0.0
  %496 = vmatpush1.msra.mxu0 0.0
  %497 = vmatprep.subr.mxu0 0.0
  %498 = vmatpush1.msra.mxu0 0.0
  %499 = vmatprep.subr.mxu0 0.0
  %500 = vmatpush1.msra.mxu0 0.0
  %501 = vmatprep.subr.mxu0 0.0
  %502 = vmatpush1.msra.mxu0 0.0
  %503 = vmatprep.subr.mxu0 0.0
  %504 = vmatpush1.msra.mxu0 0.0
  %505 = vmatprep.subr.mxu0 0.0
  %506 = vmatpush1.msra.mxu0 0.0
  %507 = vmatprep.subr.mxu0 0.0
  %508 = vmatpush1.msra.mxu0 0.0
  %509 = vmatprep.subr.mxu0 0.0
  %510 = vmatpush1.msra.mxu0 0.0
  %511 = vmatprep.subr.mxu0 0.0
  %512 = vmatpush1.msra.mxu0 0.0
  %513 = vmatprep.subr.mxu0 0.0
  %514 = vmatpush1.msra.mxu0 0.0
  %515 = vmatprep.mubr.f32.mxu0 0.0
  %516 = vmatmul.mubr.f32.gmra.mrb[0].mxu0 %v449
  %v517 = vpop.f32.mrb[0].mxu0
  %v518 = vadd.f32 %v447, %v517
  %v519 = vpop.f32.mrb[0].mxu0
  %520 = vdwg.mxu0
  %v521 = vtanh.pop %v518
  %v522 = vld [vmem:[#allocation2 + $0x8] sm:$0xff]
  %523 = vmatprep.subr.mxu0 0.0
  %524 = vmatpush1.msra.mxu0 %v23
  %525 = vmatprep.subr.mxu0 0.0
  %526 = vmatpush1.msra.mxu0 %v24
  %527 = vmatprep.subr.mxu0 0.0
  %528 = vmatpush1.msra.mxu0 %v25
  %529 = vmatprep.subr.mxu0 0.0
  %530 = vmatpush1.msra.mxu0 %v26
  %531 = vmatprep.subr.mxu0 0.0
  %532 = vmatpush1.msra.mxu0 0.0
  %533 = vmatprep.subr.mxu0 0.0
  %534 = vmatpush1.msra.mxu0 0.0
  %535 = vmatprep.subr.mxu0 0.0
  %536 = vmatpush1.msra.mxu0 0.0
  %537 = vmatprep.subr.mxu0 0.0
  %538 = vmatpush1.msra.mxu0 0.0
  %539 = vmatprep.subr.mxu0 0.0
  %540 = vmatpush1.msra.mxu0 0.0
  %541 = vmatprep.subr.mxu0 0.0
  %542 = vmatpush1.msra.mxu0 0.0
  %543 = vmatprep.subr.mxu0 0.0
  %544 = vmatpush1.msra.mxu0 0.0
  %545 = vmatprep.subr.mxu0 0.0
  %546 = vmatpush1.msra.mxu0 0.0
  %547 = vmatprep.subr.mxu0 0.0
  %548 = vmatpush1.msra.mxu0 0.0
  %549 = vmatprep.subr.mxu0 0.0
  %550 = vmatpush1.msra.mxu0 0.0
  %551 = vmatprep.subr.mxu0 0.0
  %552 = vmatpush1.msra.mxu0 0.0
  %553 = vmatprep.subr.mxu0 0.0
  %554 = vmatpush1.msra.mxu0 0.0
  %555 = vmatprep.subr.mxu0 0.0
  %556 = vmatpush1.msra.mxu0 0.0
  %557 = vmatprep.subr.mxu0 0.0
  %558 = vmatpush1.msra.mxu0 0.0
  %559 = vmatprep.subr.mxu0 0.0
  %560 = vmatpush1.msra.mxu0 0.0
  %561 = vmatprep.subr.mxu0 0.0
  %562 = vmatpush1.msra.mxu0 0.0
  %563 = vmatprep.subr.mxu0 0.0
  %564 = vmatpush1.msra.mxu0 0.0
  %565 = vmatprep.subr.mxu0 0.0
  %566 = vmatpush1.msra.mxu0 0.0
  %567 = vmatprep.subr.mxu0 0.0
  %568 = vmatpush1.msra.mxu0 0.0
  %569 = vmatprep.subr.mxu0 0.0
  %570 = vmatpush1.msra.mxu0 0.0
  %571 = vmatprep.subr.mxu0 0.0
  %572 = vmatpush1.msra.mxu0 0.0
  %573 = vmatprep.subr.mxu0 0.0
  %574 = vmatpush1.msra.mxu0 0.0
  %575 = vmatprep.subr.mxu0 0.0
  %576 = vmatpush1.msra.mxu0 0.0
  %577 = vmatprep.subr.mxu0 0.0
  %578 = vmatpush1.msra.mxu0 0.0
  %579 = vmatprep.subr.mxu0 0.0
  %580 = vmatpush1.msra.mxu0 0.0
  %581 = vmatprep.subr.mxu0 0.0
  %582 = vmatpush1.msra.mxu0 0.0
  %583 = vmatprep.subr.mxu0 0.0
  %584 = vmatpush1.msra.mxu0 0.0
  %585 = vmatprep.subr.mxu0 0.0
  %586 = vmatpush1.msra.mxu0 0.0
  %587 = vmatprep.mubr.f32.mxu0 0.0
  %588 = vmatmul.mubr.f32.gmra.mrb[0].mxu0 %v449
  %v589 = vpop.f32.mrb[0].mxu0
  %v590 = vadd.f32 0.0, %v589
  %v591 = vpop.f32.mrb[0].mxu0
  %592 = vdwg.mxu0
  %v593 = vadd.f32 %v522, %v590
  %v594 = vtanh.pop %v593
  %596 = vrot.lane.b32.xlu0 %v521, 32
  %v597 = vpop.permute.xlu0 %596
  %v599 = vsel %vm286, %v594, %v597
  %vm600 = vcmask 523264
  %v602 = vsel %vm600, %v599, 0
  %604 = vmatprep.subr.mxu0 0.0
  %605 = vmatpush1.msra.mxu0 %v27
  %606 = vmatprep.subr.mxu0 0.0
  %607 = vmatpush1.msra.mxu0 %v28
  %608 = vmatprep.subr.mxu0 0.0
  %609 = vmatpush1.msra.mxu0 %v29
  %610 = vmatprep.subr.mxu0 0.0
  %611 = vmatpush1.msra.mxu0 %v30
  %612 = vmatprep.subr.mxu0 0.0
  %613 = vmatpush1.msra.mxu0 %v31
  %614 = vmatprep.subr.mxu0 0.0
  %615 = vmatpush1.msra.mxu0 %v32
  %616 = vmatprep.subr.mxu0 0.0
  %617 = vmatpush1.msra.mxu0 %v33
  %618 = vmatprep.subr.mxu0 0.0
  %619 = vmatpush1.msra.mxu0 %v34
  %620 = vmatprep.subr.mxu0 0.0
  %621 = vmatpush1.msra.mxu0 0.0
  %622 = vmatprep.subr.mxu0 0.0
  %623 = vmatpush1.msra.mxu0 0.0
  %624 = vmatprep.subr.mxu0 0.0
  %625 = vmatpush1.msra.mxu0 0.0
  %626 = vmatprep.subr.mxu0 0.0
  %627 = vmatpush1.msra.mxu0 0.0
  %628 = vmatprep.subr.mxu0 0.0
  %629 = vmatpush1.msra.mxu0 0.0
  %630 = vmatprep.subr.mxu0 0.0
  %631 = vmatpush1.msra.mxu0 0.0
  %632 = vmatprep.subr.mxu0 0.0
  %633 = vmatpush1.msra.mxu0 0.0
  %634 = vmatprep.subr.mxu0 0.0
  %635 = vmatpush1.msra.mxu0 0.0
  %636 = vmatprep.subr.mxu0 0.0
  %637 = vmatpush1.msra.mxu0 0.0
  %638 = vmatprep.subr.mxu0 0.0
  %639 = vmatpush1.msra.mxu0 0.0
  %640 = vmatprep.subr.mxu0 0.0
  %641 = vmatpush1.msra.mxu0 0.0
  %642 = vmatprep.subr.mxu0 0.0
  %643 = vmatpush1.msra.mxu0 0.0
  %644 = vmatprep.subr.mxu0 0.0
  %645 = vmatpush1.msra.mxu0 0.0
  %646 = vmatprep.subr.mxu0 0.0
  %647 = vmatpush1.msra.mxu0 0.0
  %648 = vmatprep.subr.mxu0 0.0
  %649 = vmatpush1.msra.mxu0 0.0
  %650 = vmatprep.subr.mxu0 0.0
  %651 = vmatpush1.msra.mxu0 0.0
  %652 = vmatprep.subr.mxu0 0.0
  %653 = vmatpush1.msra.mxu0 0.0
  %654 = vmatprep.subr.mxu0 0.0
  %655 = vmatpush1.msra.mxu0 0.0
  %656 = vmatprep.subr.mxu0 0.0
  %657 = vmatpush1.msra.mxu0 0.0
  %658 = vmatprep.subr.mxu0 0.0
  %659 = vmatpush1.msra.mxu0 0.0
  %660 = vmatprep.subr.mxu0 0.0
  %661 = vmatpush1.msra.mxu0 0.0
  %662 = vmatprep.subr.mxu0 0.0
  %663 = vmatpush1.msra.mxu0 0.0
  %664 = vmatprep.subr.mxu0 0.0
  %665 = vmatpush1.msra.mxu0 0.0
  %666 = vmatprep.subr.mxu0 0.0
  %667 = vmatpush1.msra.mxu0 0.0
  %668 = vmatprep.mubr.f32.mxu0 0.0
  %669 = vmatmul.mubr.f32.gmra.mrb[0].mxu0 %v602
  %v670 = vpop.f32.mrb[0].mxu0
  %v671 = vadd.f32 %v447, %v670
  %v672 = vpop.f32.mrb[0].mxu0
  %673 = vdwg.mxu0
  %v674 = vtanh.pop %v671
  %v675 = vld [vmem:[#allocation2 + $0x10] sm:$0xff]
  %v677 = vsel %vm286, %v594, 0
  %679 = vmatprep.subr.mxu0 0.0
  %680 = vmatpush1.msra.mxu0 %v23
  %681 = vmatprep.subr.mxu0 0.0
  %682 = vmatpush1.msra.mxu0 %v24
  %683 = vmatprep.subr.mxu0 0.0
  %684 = vmatpush1.msra.mxu0 %v25
  %685 = vmatprep.subr.mxu0 0.0
  %686 = vmatpush1.msra.mxu0 %v26
  %687 = vmatprep.subr.mxu0 0.0
  %688 = vmatpush1.msra.mxu0 0.0
  %689 = vmatprep.subr.mxu0 0.0
  %690 = vmatpush1.msra.mxu0 0.0
  %691 = vmatprep.subr.mxu0 0.0
  %692 = vmatpush1.msra.mxu0 0.0
  %693 = vmatprep.subr.mxu0 0.0
  %694 = vmatpush1.msra.mxu0 0.0
  %695 = vmatprep.subr.mxu0 0.0
  %696 = vmatpush1.msra.mxu0 0.0
  %697 = vmatprep.subr.mxu0 0.0
  %698 = vmatpush1.msra.mxu0 0.0
  %699 = vmatprep.subr.mxu0 0.0
  %700 = vmatpush1.msra.mxu0 0.0
  %701 = vmatprep.subr.mxu0 0.0
  %702 = vmatpush1.msra.mxu0 0.0
  %703 = vmatprep.subr.mxu0 0.0
  %704 = vmatpush1.msra.mxu0 0.0
  %705 = vmatprep.subr.mxu0 0.0
  %706 = vmatpush1.msra.mxu0 0.0
  %707 = vmatprep.subr.mxu0 0.0
  %708 = vmatpush1.msra.mxu0 0.0
  %709 = vmatprep.subr.mxu0 0.0
  %710 = vmatpush1.msra.mxu0 0.0
  %711 = vmatprep.subr.mxu0 0.0
  %712 = vmatpush1.msra.mxu0 0.0
  %713 = vmatprep.subr.mxu0 0.0
  %714 = vmatpush1.msra.mxu0 0.0
  %715 = vmatprep.subr.mxu0 0.0
  %716 = vmatpush1.msra.mxu0 0.0
  %717 = vmatprep.subr.mxu0 0.0
  %718 = vmatpush1.msra.mxu0 0.0
  %719 = vmatprep.subr.mxu0 0.0
  %720 = vmatpush1.msra.mxu0 0.0
  %721 = vmatprep.subr.mxu0 0.0
  %722 = vmatpush1.msra.mxu0 0.0
  %723 = vmatprep.subr.mxu0 0.0
  %724 = vmatpush1.msra.mxu0 0.0
  %725 = vmatprep.subr.mxu0 0.0
  %726 = vmatpush1.msra.mxu0 0.0
  %727 = vmatprep.subr.mxu0 0.0
  %728 = vmatpush1.msra.mxu0 0.0
  %729 = vmatprep.subr.mxu0 0.0
  %730 = vmatpush1.msra.mxu0 0.0
  %731 = vmatprep.subr.mxu0 0.0
  %732 = vmatpush1.msra.mxu0 0.0
  %733 = vmatprep.subr.mxu0 0.0
  %734 = vmatpush1.msra.mxu0 0.0
  %735 = vmatprep.subr.mxu0 0.0
  %736 = vmatpush1.msra.mxu0 0.0
  %737 = vmatprep.subr.mxu0 0.0
  %738 = vmatpush1.msra.mxu0 0.0
  %739 = vmatprep.subr.mxu0 0.0
  %740 = vmatpush1.msra.mxu0 0.0
  %741 = vmatprep.subr.mxu0 0.0
  %742 = vmatpush1.msra.mxu0 0.0
  %743 = vmatprep.mubr.f32.mxu0 0.0
  %744 = vmatmul.mubr.f32.gmra.mrb[0].mxu0 %v677
  %v745 = vpop.f32.mrb[0].mxu0
  %v746 = vadd.f32 0.0, %v745
  %v747 = vpop.f32.mrb[0].mxu0
  %748 = vdwg.mxu0
  %v749 = vadd.f32 %v675, %v746
  %v750 = vtanh.pop %v749
  %752 = vrot.lane.b32.xlu0 %v674, 32
  %v753 = vpop.permute.xlu0 %752
  %v755 = vsel %vm286, %v750, %v753
  %v757 = vsel %vm600, %v755, 0
  %759 = vmatprep.subr.mxu0 0.0
  %760 = vmatpush1.msra.mxu0 %v27
  %761 = vmatprep.subr.mxu0 0.0
  %762 = vmatpush1.msra.mxu0 %v28
  %763 = vmatprep.subr.mxu0 0.0
  %764 = vmatpush1.msra.mxu0 %v29
  %765 = vmatprep.subr.mxu0 0.0
  %766 = vmatpush1.msra.mxu0 %v30
  %767 = vmatprep.subr.mxu0 0.0
  %768 = vmatpush1.msra.mxu0 %v31
  %769 = vmatprep.subr.mxu0 0.0
  %770 = vmatpush1.msra.mxu0 %v32
  %771 = vmatprep.subr.mxu0 0.0
  %772 = vmatpush1.msra.mxu0 %v33
  %773 = vmatprep.subr.mxu0 0.0
  %774 = vmatpush1.msra.mxu0 %v34
  %775 = vmatprep.subr.mxu0 0.0
  %776 = vmatpush1.msra.mxu0 0.0
  %777 = vmatprep.subr.mxu0 0.0
  %778 = vmatpush1.msra.mxu0 0.0
  %779 = vmatprep.subr.mxu0 0.0
  %780 = vmatpush1.msra.mxu0 0.0
  %781 = vmatprep.subr.mxu0 0.0
  %782 = vmatpush1.msra.mxu0 0.0
  %783 = vmatprep.subr.mxu0 0.0
  %784 = vmatpush1.msra.mxu0 0.0
  %785 = vmatprep.subr.mxu0 0.0
  %786 = vmatpush1.msra.mxu0 0.0
  %787 = vmatprep.subr.mxu0 0.0
  %788 = vmatpush1.msra.mxu0 0.0
  %789 = vmatprep.subr.mxu0 0.0
  %790 = vmatpush1.msra.mxu0 0.0
  %791 = vmatprep.subr.mxu0 0.0
  %792 = vmatpush1.msra.mxu0 0.0
  %793 = vmatprep.subr.mxu0 0.0
  %794 = vmatpush1.msra.mxu0 0.0
  %795 = vmatprep.subr.mxu0 0.0
  %796 = vmatpush1.msra.mxu0 0.0
  %797 = vmatprep.subr.mxu0 0.0
  %798 = vmatpush1.msra.mxu0 0.0
  %799 = vmatprep.subr.mxu0 0.0
  %800 = vmatpush1.msra.mxu0 0.0
  %801 = vmatprep.subr.mxu0 0.0
  %802 = vmatpush1.msra.mxu0 0.0
  %803 = vmatprep.subr.mxu0 0.0
  %804 = vmatpush1.msra.mxu0 0.0
  %805 = vmatprep.subr.mxu0 0.0
  %806 = vmatpush1.msra.mxu0 0.0
  %807 = vmatprep.subr.mxu0 0.0
  %808 = vmatpush1.msra.mxu0 0.0
  %809 = vmatprep.subr.mxu0 0.0
  %810 = vmatpush1.msra.mxu0 0.0
  %811 = vmatprep.subr.mxu0 0.0
  %812 = vmatpush1.msra.mxu0 0.0
  %813 = vmatprep.subr.mxu0 0.0
  %814 = vmatpush1.msra.mxu0 0.0
  %815 = vmatprep.subr.mxu0 0.0
  %816 = vmatpush1.msra.mxu0 0.0
  %817 = vmatprep.subr.mxu0 0.0
  %818 = vmatpush1.msra.mxu0 0.0
  %819 = vmatprep.subr.mxu0 0.0
  %820 = vmatpush1.msra.mxu0 0.0
  %821 = vmatprep.subr.mxu0 0.0
  %822 = vmatpush1.msra.mxu0 0.0
  %823 = vmatprep.mubr.f32.mxu0 0.0
  %824 = vmatmul.mubr.f32.gmra.mrb[0].mxu0 %v757
  %v825 = vpop.f32.mrb[0].mxu0
  %v826 = vadd.f32 %v447, %v825
  %v827 = vpop.f32.mrb[0].mxu0
  %828 = vdwg.mxu0
  %v829 = vtanh.pop %v826
  %v830 = vld [vmem:[#allocation2 + $0x18] sm:$0xff]
  %v832 = vsel %vm286, %v750, 0
  %834 = vmatprep.subr.mxu0 0.0
  %835 = vmatpush1.msra.mxu0 %v23
  %836 = vmatprep.subr.mxu0 0.0
  %837 = vmatpush1.msra.mxu0 %v24
  %838 = vmatprep.subr.mxu0 0.0
  %839 = vmatpush1.msra.mxu0 %v25
  %840 = vmatprep.subr.mxu0 0.0
  %841 = vmatpush1.msra.mxu0 %v26
  %842 = vmatprep.subr.mxu0 0.0
  %843 = vmatpush1.msra.mxu0 0.0
  %844 = vmatprep.subr.mxu0 0.0
  %845 = vmatpush1.msra.mxu0 0.0
  %846 = vmatprep.subr.mxu0 0.0
  %847 = vmatpush1.msra.mxu0 0.0
  %848 = vmatprep.subr.mxu0 0.0
  %849 = vmatpush1.msra.mxu0 0.0
  %850 = vmatprep.subr.mxu0 0.0
  %851 = vmatpush1.msra.mxu0 0.0
  %852 = vmatprep.subr.mxu0 0.0
  %853 = vmatpush1.msra.mxu0 0.0
  %854 = vmatprep.subr.mxu0 0.0
  %855 = vmatpush1.msra.mxu0 0.0
  %856 = vmatprep.subr.mxu0 0.0
  %857 = vmatpush1.msra.mxu0 0.0
  %858 = vmatprep.subr.mxu0 0.0
  %859 = vmatpush1.msra.mxu0 0.0
  %860 = vmatprep.subr.mxu0 0.0
  %861 = vmatpush1.msra.mxu0 0.0
  %862 = vmatprep.subr.mxu0 0.0
  %863 = vmatpush1.msra.mxu0 0.0
  %864 = vmatprep.subr.mxu0 0.0
  %865 = vmatpush1.msra.mxu0 0.0
  %866 = vmatprep.subr.mxu0 0.0
  %867 = vmatpush1.msra.mxu0 0.0
  %868 = vmatprep.subr.mxu0 0.0
  %869 = vmatpush1.msra.mxu0 0.0
  %870 = vmatprep.subr.mxu0 0.0
  %871 = vmatpush1.msra.mxu0 0.0
  %872 = vmatprep.subr.mxu0 0.0
  %873 = vmatpush1.msra.mxu0 0.0
  %874 = vmatprep.subr.mxu0 0.0
  %875 = vmatpush1.msra.mxu0 0.0
  %876 = vmatprep.subr.mxu0 0.0
  %877 = vmatpush1.msra.mxu0 0.0
  %878 = vmatprep.subr.mxu0 0.0
  %879 = vmatpush1.msra.mxu0 0.0
  %880 = vmatprep.subr.mxu0 0.0
  %881 = vmatpush1.msra.mxu0 0.0
  %882 = vmatprep.subr.mxu0 0.0
  %883 = vmatpush1.msra.mxu0 0.0
  %884 = vmatprep.subr.mxu0 0.0
  %885 = vmatpush1.msra.mxu0 0.0
  %886 = vmatprep.subr.mxu0 0.0
  %887 = vmatpush1.msra.mxu0 0.0
  %888 = vmatprep.subr.mxu0 0.0
  %889 = vmatpush1.msra.mxu0 0.0
  %890 = vmatprep.subr.mxu0 0.0
  %891 = vmatpush1.msra.mxu0 0.0
  %892 = vmatprep.subr.mxu0 0.0
  %893 = vmatpush1.msra.mxu0 0.0
  %894 = vmatprep.subr.mxu0 0.0
  %895 = vmatpush1.msra.mxu0 0.0
  %896 = vmatprep.subr.mxu0 0.0
  %897 = vmatpush1.msra.mxu0 0.0
  %898 = vmatprep.mubr.f32.mxu0 0.0
  %899 = vmatmul.mubr.f32.gmra.mrb[0].mxu0 %v832
  %v900 = vpop.f32.mrb[0].mxu0
  %v901 = vadd.f32 0.0, %v900
  %v902 = vpop.f32.mrb[0].mxu0
  %903 = vdwg.mxu0
  %v904 = vadd.f32 %v830, %v901
  %v905 = vtanh.pop %v904
  %907 = vrot.lane.b32.xlu0 %v829, 32
  %v908 = vpop.permute.xlu0 %907
  %v910 = vsel %vm286, %v905, %v908
  %v912 = vsel %vm600, %v910, 0
  %914 = vmatprep.subr.mxu0 0.0
  %915 = vmatpush1.msra.mxu0 %v27
  %916 = vmatprep.subr.mxu0 0.0
  %917 = vmatpush1.msra.mxu0 %v28
  %918 = vmatprep.subr.mxu0 0.0
  %919 = vmatpush1.msra.mxu0 %v29
  %920 = vmatprep.subr.mxu0 0.0
  %921 = vmatpush1.msra.mxu0 %v30
  %922 = vmatprep.subr.mxu0 0.0
  %923 = vmatpush1.msra.mxu0 %v31
  %924 = vmatprep.subr.mxu0 0.0
  %925 = vmatpush1.msra.mxu0 %v32
  %926 = vmatprep.subr.mxu0 0.0
  %927 = vmatpush1.msra.mxu0 %v33
  %928 = vmatprep.subr.mxu0 0.0
  %929 = vmatpush1.msra.mxu0 %v34
  %930 = vmatprep.subr.mxu0 0.0
  %931 = vmatpush1.msra.mxu0 0.0
  %932 = vmatprep.subr.mxu0 0.0
  %933 = vmatpush1.msra.mxu0 0.0
  %934 = vmatprep.subr.mxu0 0.0
  %935 = vmatpush1.msra.mxu0 0.0
  %936 = vmatprep.subr.mxu0 0.0
  %937 = vmatpush1.msra.mxu0 0.0
  %938 = vmatprep.subr.mxu0 0.0
  %939 = vmatpush1.msra.mxu0 0.0
  %940 = vmatprep.subr.mxu0 0.0
  %941 = vmatpush1.msra.mxu0 0.0
  %942 = vmatprep.subr.mxu0 0.0
  %943 = vmatpush1.msra.mxu0 0.0
  %944 = vmatprep.subr.mxu0 0.0
  %945 = vmatpush1.msra.mxu0 0.0
  %946 = vmatprep.subr.mxu0 0.0
  %947 = vmatpush1.msra.mxu0 0.0
  %948 = vmatprep.subr.mxu0 0.0
  %949 = vmatpush1.msra.mxu0 0.0
  %950 = vmatprep.subr.mxu0 0.0
  %951 = vmatpush1.msra.mxu0 0.0
  %952 = vmatprep.subr.mxu0 0.0
  %953 = vmatpush1.msra.mxu0 0.0
  %954 = vmatprep.subr.mxu0 0.0
  %955 = vmatpush1.msra.mxu0 0.0
  %956 = vmatprep.subr.mxu0 0.0
  %957 = vmatpush1.msra.mxu0 0.0
  %958 = vmatprep.subr.mxu0 0.0
  %959 = vmatpush1.msra.mxu0 0.0
  %960 = vmatprep.subr.mxu0 0.0
  %961 = vmatpush1.msra.mxu0 0.0
  %962 = vmatprep.subr.mxu0 0.0
  %963 = vmatpush1.msra.mxu0 0.0
  %964 = vmatprep.subr.mxu0 0.0
  %965 = vmatpush1.msra.mxu0 0.0
  %966 = vmatprep.subr.mxu0 0.0
  %967 = vmatpush1.msra.mxu0 0.0
  %968 = vmatprep.subr.mxu0 0.0
  %969 = vmatpush1.msra.mxu0 0.0
  %970 = vmatprep.subr.mxu0 0.0
  %971 = vmatpush1.msra.mxu0 0.0
  %972 = vmatprep.subr.mxu0 0.0
  %973 = vmatpush1.msra.mxu0 0.0
  %974 = vmatprep.subr.mxu0 0.0
  %975 = vmatpush1.msra.mxu0 0.0
  %976 = vmatprep.subr.mxu0 0.0
  %977 = vmatpush1.msra.mxu0 0.0
  %978 = vmatprep.mubr.f32.mxu0 0.0
  %979 = vmatmul.mubr.f32.gmra.mrb[0].mxu0 %v912
  %v980 = vpop.f32.mrb[0].mxu0
  %v981 = vadd.f32 %v447, %v980
  %v982 = vpop.f32.mrb[0].mxu0
  %983 = vdwg.mxu0
  %v984 = vtanh.pop %v981
  %v985 = vld [vmem:[#allocation2 + $0x20] sm:$0xff]
  %v987 = vsel %vm286, %v905, 0
  %989 = vmatprep.subr.mxu0 0.0
  %990 = vmatpush1.msra.mxu0 %v23
  %991 = vmatprep.subr.mxu0 0.0
  %992 = vmatpush1.msra.mxu0 %v24
  %993 = vmatprep.subr.mxu0 0.0
  %994 = vmatpush1.msra.mxu0 %v25
  %995 = vmatprep.subr.mxu0 0.0
  %996 = vmatpush1.msra.mxu0 %v26
  %997 = vmatprep.subr.mxu0 0.0
  %998 = vmatpush1.msra.mxu0 0.0
  %999 = vmatprep.subr.mxu0 0.0
  %1000 = vmatpush1.msra.mxu0 0.0
  %1001 = vmatprep.subr.mxu0 0.0
  %1002 = vmatpush1.msra.mxu0 0.0
  %1003 = vmatprep.subr.mxu0 0.0
  %1004 = vmatpush1.msra.mxu0 0.0
  %1005 = vmatprep.subr.mxu0 0.0
  %1006 = vmatpush1.msra.mxu0 0.0
  %1007 = vmatprep.subr.mxu0 0.0
  %1008 = vmatpush1.msra.mxu0 0.0
  %1009 = vmatprep.subr.mxu0 0.0
  %1010 = vmatpush1.msra.mxu0 0.0
  %1011 = vmatprep.subr.mxu0 0.0
  %1012 = vmatpush1.msra.mxu0 0.0
  %1013 = vmatprep.subr.mxu0 0.0
  %1014 = vmatpush1.msra.mxu0 0.0
  %1015 = vmatprep.subr.mxu0 0.0
  %1016 = vmatpush1.msra.mxu0 0.0
  %1017 = vmatprep.subr.mxu0 0.0
  %1018 = vmatpush1.msra.mxu0 0.0
  %1019 = vmatprep.subr.mxu0 0.0
  %1020 = vmatpush1.msra.mxu0 0.0
  %1021 = vmatprep.subr.mxu0 0.0
  %1022 = vmatpush1.msra.mxu0 0.0
  %1023 = vmatprep.subr.mxu0 0.0
  %1024 = vmatpush1.msra.mxu0 0.0
  %1025 = vmatprep.subr.mxu0 0.0
  %1026 = vmatpush1.msra.mxu0 0.0
  %1027 = vmatprep.subr.mxu0 0.0
  %1028 = vmatpush1.msra.mxu0 0.0
  %1029 = vmatprep.subr.mxu0 0.0
  %1030 = vmatpush1.msra.mxu0 0.0
  %1031 = vmatprep.subr.mxu0 0.0
  %1032 = vmatpush1.msra.mxu0 0.0
  %1033 = vmatprep.subr.mxu0 0.0
  %1034 = vmatpush1.msra.mxu0 0.0
  %1035 = vmatprep.subr.mxu0 0.0
  %1036 = vmatpush1.msra.mxu0 0.0
  %1037 = vmatprep.subr.mxu0 0.0
  %1038 = vmatpush1.msra.mxu0 0.0
  %1039 = vmatprep.subr.mxu0 0.0
  %1040 = vmatpush1.msra.mxu0 0.0
  %1041 = vmatprep.subr.mxu0 0.0
  %1042 = vmatpush1.msra.mxu0 0.0
  %1043 = vmatprep.subr.mxu0 0.0
  %1044 = vmatpush1.msra.mxu0 0.0
  %1045 = vmatprep.subr.mxu0 0.0
  %1046 = vmatpush1.msra.mxu0 0.0
  %1047 = vmatprep.subr.mxu0 0.0
  %1048 = vmatpush1.msra.mxu0 0.0
  %1049 = vmatprep.subr.mxu0 0.0
  %1050 = vmatpush1.msra.mxu0 0.0
  %1051 = vmatprep.subr.mxu0 0.0
  %1052 = vmatpush1.msra.mxu0 0.0
  %1053 = vmatprep.mubr.f32.mxu0 0.0
  %1054 = vmatmul.mubr.f32.gmra.mrb[0].mxu0 %v987
  %v1055 = vpop.f32.mrb[0].mxu0
  %v1056 = vadd.f32 0.0, %v1055
  %v1057 = vpop.f32.mrb[0].mxu0
  %1058 = vdwg.mxu0
  %v1059 = vadd.f32 %v985, %v1056
  %v1060 = vtanh.pop %v1059
  %1062 = vrot.lane.b32.xlu0 %v984, 32
  %v1063 = vpop.permute.xlu0 %1062
  %v1065 = vsel %vm286, %v1060, %v1063
  %v1067 = vsel %vm600, %v1065, 0
  %1069 = vmatprep.subr.mxu0 0.0
  %1070 = vmatpush1.msra.mxu0 %v27
  %1071 = vmatprep.subr.mxu0 0.0
  %1072 = vmatpush1.msra.mxu0 %v28
  %1073 = vmatprep.subr.mxu0 0.0
  %1074 = vmatpush1.msra.mxu0 %v29
  %1075 = vmatprep.subr.mxu0 0.0
  %1076 = vmatpush1.msra.mxu0 %v30
  %1077 = vmatprep.subr.mxu0 0.0
  %1078 = vmatpush1.msra.mxu0 %v31
  %1079 = vmatprep.subr.mxu0 0.0
  %1080 = vmatpush1.msra.mxu0 %v32
  %1081 = vmatprep.subr.mxu0 0.0
  %1082 = vmatpush1.msra.mxu0 %v33
  %1083 = vmatprep.subr.mxu0 0.0
  %1084 = vmatpush1.msra.mxu0 %v34
  %1085 = vmatprep.subr.mxu0 0.0
  %1086 = vmatpush1.msra.mxu0 0.0
  %1087 = vmatprep.subr.mxu0 0.0
  %1088 = vmatpush1.msra.mxu0 0.0
  %1089 = vmatprep.subr.mxu0 0.0
  %1090 = vmatpush1.msra.mxu0 0.0
  %1091 = vmatprep.subr.mxu0 0.0
  %1092 = vmatpush1.msra.mxu0 0.0
  %1093 = vmatprep.subr.mxu0 0.0
  %1094 = vmatpush1.msra.mxu0 0.0
  %1095 = vmatprep.subr.mxu0 0.0
  %1096 = vmatpush1.msra.mxu0 0.0
  %1097 = vmatprep.subr.mxu0 0.0
  %1098 = vmatpush1.msra.mxu0 0.0
  %1099 = vmatprep.subr.mxu0 0.0
  %1100 = vmatpush1.msra.mxu0 0.0
  %1101 = vmatprep.subr.mxu0 0.0
  %1102 = vmatpush1.msra.mxu0 0.0
  %1103 = vmatprep.subr.mxu0 0.0
  %1104 = vmatpush1.msra.mxu0 0.0
  %1105 = vmatprep.subr.mxu0 0.0
  %1106 = vmatpush1.msra.mxu0 0.0
  %1107 = vmatprep.subr.mxu0 0.0
  %1108 = vmatpush1.msra.mxu0 0.0
  %1109 = vmatprep.subr.mxu0 0.0
  %1110 = vmatpush1.msra.mxu0 0.0
  %1111 = vmatprep.subr.mxu0 0.0
  %1112 = vmatpush1.msra.mxu0 0.0
  %1113 = vmatprep.subr.mxu0 0.0
  %1114 = vmatpush1.msra.mxu0 0.0
  %1115 = vmatprep.subr.mxu0 0.0
  %1116 = vmatpush1.msra.mxu0 0.0
  %1117 = vmatprep.subr.mxu0 0.0
  %1118 = vmatpush1.msra.mxu0 0.0
  %1119 = vmatprep.subr.mxu0 0.0
  %1120 = vmatpush1.msra.mxu0 0.0
  %1121 = vmatprep.subr.mxu0 0.0
  %1122 = vmatpush1.msra.mxu0 0.0
  %1123 = vmatprep.subr.mxu0 0.0
  %1124 = vmatpush1.msra.mxu0 0.0
  %1125 = vmatprep.subr.mxu0 0.0
  %1126 = vmatpush1.msra.mxu0 0.0
  %1127 = vmatprep.subr.mxu0 0.0
  %1128 = vmatpush1.msra.mxu0 0.0
  %1129 = vmatprep.subr.mxu0 0.0
  %1130 = vmatpush1.msra.mxu0 0.0
  %1131 = vmatprep.subr.mxu0 0.0
  %1132 = vmatpush1.msra.mxu0 0.0
  %1133 = vmatprep.mubr.f32.mxu0 0.0
  %1134 = vmatmul.mubr.f32.gmra.mrb[0].mxu0 %v1067
  %v1135 = vpop.f32.mrb[0].mxu0
  %v1136 = vadd.f32 %v447, %v1135
  %v1137 = vpop.f32.mrb[0].mxu0
  %1138 = vdwg.mxu0
  %v1139 = vtanh.pop %v1136
  %v1140 = vld [vmem:[#allocation2 + $0x28] sm:$0xff]
  %v1142 = vsel %vm286, %v1060, 0
  %1144 = vmatprep.subr.mxu0 0.0
  %1145 = vmatpush1.msra.mxu0 %v23
  %1146 = vmatprep.subr.mxu0 0.0
  %1147 = vmatpush1.msra.mxu0 %v24
  %1148 = vmatprep.subr.mxu0 0.0
  %1149 = vmatpush1.msra.mxu0 %v25
  %1150 = vmatprep.subr.mxu0 0.0
  %1151 = vmatpush1.msra.mxu0 %v26
  %1152 = vmatprep.subr.mxu0 0.0
  %1153 = vmatpush1.msra.mxu0 0.0
  %1154 = vmatprep.subr.mxu0 0.0
  %1155 = vmatpush1.msra.mxu0 0.0
  %1156 = vmatprep.subr.mxu0 0.0
  %1157 = vmatpush1.msra.mxu0 0.0
  %1158 = vmatprep.subr.mxu0 0.0
  %1159 = vmatpush1.msra.mxu0 0.0
  %1160 = vmatprep.subr.mxu0 0.0
  %1161 = vmatpush1.msra.mxu0 0.0
  %1162 = vmatprep.subr.mxu0 0.0
  %1163 = vmatpush1.msra.mxu0 0.0
  %1164 = vmatprep.subr.mxu0 0.0
  %1165 = vmatpush1.msra.mxu0 0.0
  %1166 = vmatprep.subr.mxu0 0.0
  %1167 = vmatpush1.msra.mxu0 0.0
  %1168 = vmatprep.subr.mxu0 0.0
  %1169 = vmatpush1.msra.mxu0 0.0
  %1170 = vmatprep.subr.mxu0 0.0
  %1171 = vmatpush1.msra.mxu0 0.0
  %1172 = vmatprep.subr.mxu0 0.0
  %1173 = vmatpush1.msra.mxu0 0.0
  %1174 = vmatprep.subr.mxu0 0.0
  %1175 = vmatpush1.msra.mxu0 0.0
  %1176 = vmatprep.subr.mxu0 0.0
  %1177 = vmatpush1.msra.mxu0 0.0
  %1178 = vmatprep.subr.mxu0 0.0
  %1179 = vmatpush1.msra.mxu0 0.0
  %1180 = vmatprep.subr.mxu0 0.0
  %1181 = vmatpush1.msra.mxu0 0.0
  %1182 = vmatprep.subr.mxu0 0.0
  %1183 = vmatpush1.msra.mxu0 0.0
  %1184 = vmatprep.subr.mxu0 0.0
  %1185 = vmatpush1.msra.mxu0 0.0
  %1186 = vmatprep.subr.mxu0 0.0
  %1187 = vmatpush1.msra.mxu0 0.0
  %1188 = vmatprep.subr.mxu0 0.0
  %1189 = vmatpush1.msra.mxu0 0.0
  %1190 = vmatprep.subr.mxu0 0.0
  %1191 = vmatpush1.msra.mxu0 0.0
  %1192 = vmatprep.subr.mxu0 0.0
  %1193 = vmatpush1.msra.mxu0 0.0
  %1194 = vmatprep.subr.mxu0 0.0
  %1195 = vmatpush1.msra.mxu0 0.0
  %1196 = vmatprep.subr.mxu0 0.0
  %1197 = vmatpush1.msra.mxu0 0.0
  %1198 = vmatprep.subr.mxu0 0.0
  %1199 = vmatpush1.msra.mxu0 0.0
  %1200 = vmatprep.subr.mxu0 0.0
  %1201 = vmatpush1.msra.mxu0 0.0
  %1202 = vmatprep.subr.mxu0 0.0
  %1203 = vmatpush1.msra.mxu0 0.0
  %1204 = vmatprep.subr.mxu0 0.0
  %1205 = vmatpush1.msra.mxu0 0.0
  %1206 = vmatprep.subr.mxu0 0.0
  %1207 = vmatpush1.msra.mxu0 0.0
  %1208 = vmatprep.mubr.f32.mxu0 0.0
  %1209 = vmatmul.mubr.f32.gmra.mrb[0].mxu0 %v1142
  %v1210 = vpop.f32.mrb[0].mxu0
  %v1211 = vadd.f32 0.0, %v1210
  %v1212 = vpop.f32.mrb[0].mxu0
  %1213 = vdwg.mxu0
  %v1214 = vadd.f32 %v1140, %v1211
  %v1215 = vtanh.pop %v1214
  %1217 = vrot.lane.b32.xlu0 %v1139, 32
  %v1218 = vpop.permute.xlu0 %1217
  %v1220 = vsel %vm286, %v1215, %v1218
  %v1222 = vsel %vm600, %v1220, 0
  %1224 = vmatprep.subr.mxu0 0.0
  %1225 = vmatpush1.msra.mxu0 %v27
  %1226 = vmatprep.subr.mxu0 0.0
  %1227 = vmatpush1.msra.mxu0 %v28
  %1228 = vmatprep.subr.mxu0 0.0
  %1229 = vmatpush1.msra.mxu0 %v29
  %1230 = vmatprep.subr.mxu0 0.0
  %1231 = vmatpush1.msra.mxu0 %v30
  %1232 = vmatprep.subr.mxu0 0.0
  %1233 = vmatpush1.msra.mxu0 %v31
  %1234 = vmatprep.subr.mxu0 0.0
  %1235 = vmatpush1.msra.mxu0 %v32
  %1236 = vmatprep.subr.mxu0 0.0
  %1237 = vmatpush1.msra.mxu0 %v33
  %1238 = vmatprep.subr.mxu0 0.0
  %1239 = vmatpush1.msra.mxu0 %v34
  %1240 = vmatprep.subr.mxu0 0.0
  %1241 = vmatpush1.msra.mxu0 0.0
  %1242 = vmatprep.subr.mxu0 0.0
  %1243 = vmatpush1.msra.mxu0 0.0
  %1244 = vmatprep.subr.mxu0 0.0
  %1245 = vmatpush1.msra.mxu0 0.0
  %1246 = vmatprep.subr.mxu0 0.0
  %1247 = vmatpush1.msra.mxu0 0.0
  %1248 = vmatprep.subr.mxu0 0.0
  %1249 = vmatpush1.msra.mxu0 0.0
  %1250 = vmatprep.subr.mxu0 0.0
  %1251 = vmatpush1.msra.mxu0 0.0
  %1252 = vmatprep.subr.mxu0 0.0
  %1253 = vmatpush1.msra.mxu0 0.0
  %1254 = vmatprep.subr.mxu0 0.0
  %1255 = vmatpush1.msra.mxu0 0.0
  %1256 = vmatprep.subr.mxu0 0.0
  %1257 = vmatpush1.msra.mxu0 0.0
  %1258 = vmatprep.subr.mxu0 0.0
  %1259 = vmatpush1.msra.mxu0 0.0
  %1260 = vmatprep.subr.mxu0 0.0
  %1261 = vmatpush1.msra.mxu0 0.0
  %1262 = vmatprep.subr.mxu0 0.0
  %1263 = vmatpush1.msra.mxu0 0.0
  %1264 = vmatprep.subr.mxu0 0.0
  %1265 = vmatpush1.msra.mxu0 0.0
  %1266 = vmatprep.subr.mxu0 0.0
  %1267 = vmatpush1.msra.mxu0 0.0
  %1268 = vmatprep.subr.mxu0 0.0
  %1269 = vmatpush1.msra.mxu0 0.0
  %1270 = vmatprep.subr.mxu0 0.0
  %1271 = vmatpush1.msra.mxu0 0.0
  %1272 = vmatprep.subr.mxu0 0.0
  %1273 = vmatpush1.msra.mxu0 0.0
  %1274 = vmatprep.subr.mxu0 0.0
  %1275 = vmatpush1.msra.mxu0 0.0
  %1276 = vmatprep.subr.mxu0 0.0
  %1277 = vmatpush1.msra.mxu0 0.0
  %1278 = vmatprep.subr.mxu0 0.0
  %1279 = vmatpush1.msra.mxu0 0.0
  %1280 = vmatprep.subr.mxu0 0.0
  %1281 = vmatpush1.msra.mxu0 0.0
  %1282 = vmatprep.subr.mxu0 0.0
  %1283 = vmatpush1.msra.mxu0 0.0
  %1284 = vmatprep.subr.mxu0 0.0
  %1285 = vmatpush1.msra.mxu0 0.0
  %1286 = vmatprep.subr.mxu0 0.0
  %1287 = vmatpush1.msra.mxu0 0.0
  %1288 = vmatprep.mubr.f32.mxu0 0.0
  %1289 = vmatmul.mubr.f32.gmra.mrb[0].mxu0 %v1222
  %v1290 = vpop.f32.mrb[0].mxu0
  %v1291 = vadd.f32 %v447, %v1290
  %v1292 = vpop.f32.mrb[0].mxu0
  %1293 = vdwg.mxu0
  %v1294 = vtanh.pop %v1291
  %v1295 = vld [vmem:[#allocation2 + $0x30] sm:$0xff]
  %v1297 = vsel %vm286, %v1215, 0
  %1299 = vmatprep.subr.mxu0 0.0
  %1300 = vmatpush1.msra.mxu0 %v23
  %1301 = vmatprep.subr.mxu0 0.0
  %1302 = vmatpush1.msra.mxu0 %v24
  %1303 = vmatprep.subr.mxu0 0.0
  %1304 = vmatpush1.msra.mxu0 %v25
  %1305 = vmatprep.subr.mxu0 0.0
  %1306 = vmatpush1.msra.mxu0 %v26
  %1307 = vmatprep.subr.mxu0 0.0
  %1308 = vmatpush1.msra.mxu0 0.0
  %1309 = vmatprep.subr.mxu0 0.0
  %1310 = vmatpush1.msra.mxu0 0.0
  %1311 = vmatprep.subr.mxu0 0.0
  %1312 = vmatpush1.msra.mxu0 0.0
  %1313 = vmatprep.subr.mxu0 0.0
  %1314 = vmatpush1.msra.mxu0 0.0
  %1315 = vmatprep.subr.mxu0 0.0
  %1316 = vmatpush1.msra.mxu0 0.0
  %1317 = vmatprep.subr.mxu0 0.0
  %1318 = vmatpush1.msra.mxu0 0.0
  %1319 = vmatprep.subr.mxu0 0.0
  %1320 = vmatpush1.msra.mxu0 0.0
  %1321 = vmatprep.subr.mxu0 0.0
  %1322 = vmatpush1.msra.mxu0 0.0
  %1323 = vmatprep.subr.mxu0 0.0
  %1324 = vmatpush1.msra.mxu0 0.0
  %1325 = vmatprep.subr.mxu0 0.0
  %1326 = vmatpush1.msra.mxu0 0.0
  %1327 = vmatprep.subr.mxu0 0.0
  %1328 = vmatpush1.msra.mxu0 0.0
  %1329 = vmatprep.subr.mxu0 0.0
  %1330 = vmatpush1.msra.mxu0 0.0
  %1331 = vmatprep.subr.mxu0 0.0
  %1332 = vmatpush1.msra.mxu0 0.0
  %1333 = vmatprep.subr.mxu0 0.0
  %1334 = vmatpush1.msra.mxu0 0.0
  %1335 = vmatprep.subr.mxu0 0.0
  %1336 = vmatpush1.msra.mxu0 0.0
  %1337 = vmatprep.subr.mxu0 0.0
  %1338 = vmatpush1.msra.mxu0 0.0
  %1339 = vmatprep.subr.mxu0 0.0
  %1340 = vmatpush1.msra.mxu0 0.0
  %1341 = vmatprep.subr.mxu0 0.0
  %1342 = vmatpush1.msra.mxu0 0.0
  %1343 = vmatprep.subr.mxu0 0.0
  %1344 = vmatpush1.msra.mxu0 0.0
  %1345 = vmatprep.subr.mxu0 0.0
  %1346 = vmatpush1.msra.mxu0 0.0
  %1347 = vmatprep.subr.mxu0 0.0
  %1348 = vmatpush1.msra.mxu0 0.0
  %1349 = vmatprep.subr.mxu0 0.0
  %1350 = vmatpush1.msra.mxu0 0.0
  %1351 = vmatprep.subr.mxu0 0.0
  %1352 = vmatpush1.msra.mxu0 0.0
  %1353 = vmatprep.subr.mxu0 0.0
  %1354 = vmatpush1.msra.mxu0 0.0
  %1355 = vmatprep.subr.mxu0 0.0
  %1356 = vmatpush1.msra.mxu0 0.0
  %1357 = vmatprep.subr.mxu0 0.0
  %1358 = vmatpush1.msra.mxu0 0.0
  %1359 = vmatprep.subr.mxu0 0.0
  %1360 = vmatpush1.msra.mxu0 0.0
  %1361 = vmatprep.subr.mxu0 0.0
  %1362 = vmatpush1.msra.mxu0 0.0
  %1363 = vmatprep.mubr.f32.mxu0 0.0
  %1364 = vmatmul.mubr.f32.gmra.mrb[0].mxu0 %v1297
  %v1365 = vpop.f32.mrb[0].mxu0
  %v1366 = vadd.f32 0.0, %v1365
  %v1367 = vpop.f32.mrb[0].mxu0
  %1368 = vdwg.mxu0
  %v1369 = vadd.f32 %v1295, %v1366
  %v1370 = vtanh.pop %v1369
  %1372 = vrot.lane.b32.xlu0 %v1294, 32
  %v1373 = vpop.permute.xlu0 %1372
  %v1375 = vsel %vm286, %v1370, %v1373
  %v1377 = vsel %vm600, %v1375, 0
  %1379 = vmatprep.subr.mxu0 0.0
  %1380 = vmatpush1.msra.mxu0 %v27
  %1381 = vmatprep.subr.mxu0 0.0
  %1382 = vmatpush1.msra.mxu0 %v28
  %1383 = vmatprep.subr.mxu0 0.0
  %1384 = vmatpush1.msra.mxu0 %v29
  %1385 = vmatprep.subr.mxu0 0.0
  %1386 = vmatpush1.msra.mxu0 %v30
  %1387 = vmatprep.subr.mxu0 0.0
  %1388 = vmatpush1.msra.mxu0 %v31
  %1389 = vmatprep.subr.mxu0 0.0
  %1390 = vmatpush1.msra.mxu0 %v32
  %1391 = vmatprep.subr.mxu0 0.0
  %1392 = vmatpush1.msra.mxu0 %v33
  %1393 = vmatprep.subr.mxu0 0.0
  %1394 = vmatpush1.msra.mxu0 %v34
  %1395 = vmatprep.subr.mxu0 0.0
  %1396 = vmatpush1.msra.mxu0 0.0
  %1397 = vmatprep.subr.mxu0 0.0
  %1398 = vmatpush1.msra.mxu0 0.0
  %1399 = vmatprep.subr.mxu0 0.0
  %1400 = vmatpush1.msra.mxu0 0.0
  %1401 = vmatprep.subr.mxu0 0.0
  %1402 = vmatpush1.msra.mxu0 0.0
  %1403 = vmatprep.subr.mxu0 0.0
  %1404 = vmatpush1.msra.mxu0 0.0
  %1405 = vmatprep.subr.mxu0 0.0
  %1406 = vmatpush1.msra.mxu0 0.0
  %1407 = vmatprep.subr.mxu0 0.0
  %1408 = vmatpush1.msra.mxu0 0.0
  %1409 = vmatprep.subr.mxu0 0.0
  %1410 = vmatpush1.msra.mxu0 0.0
  %1411 = vmatprep.subr.mxu0 0.0
  %1412 = vmatpush1.msra.mxu0 0.0
  %1413 = vmatprep.subr.mxu0 0.0
  %1414 = vmatpush1.msra.mxu0 0.0
  %1415 = vmatprep.subr.mxu0 0.0
  %1416 = vmatpush1.msra.mxu0 0.0
  %1417 = vmatprep.subr.mxu0 0.0
  %1418 = vmatpush1.msra.mxu0 0.0
  %1419 = vmatprep.subr.mxu0 0.0
  %1420 = vmatpush1.msra.mxu0 0.0
  %1421 = vmatprep.subr.mxu0 0.0
  %1422 = vmatpush1.msra.mxu0 0.0
  %1423 = vmatprep.subr.mxu0 0.0
  %1424 = vmatpush1.msra.mxu0 0.0
  %1425 = vmatprep.subr.mxu0 0.0
  %1426 = vmatpush1.msra.mxu0 0.0
  %1427 = vmatprep.subr.mxu0 0.0
  %1428 = vmatpush1.msra.mxu0 0.0
  %1429 = vmatprep.subr.mxu0 0.0
  %1430 = vmatpush1.msra.mxu0 0.0
  %1431 = vmatprep.subr.mxu0 0.0
  %1432 = vmatpush1.msra.mxu0 0.0
  %1433 = vmatprep.subr.mxu0 0.0
  %1434 = vmatpush1.msra.mxu0 0.0
  %1435 = vmatprep.subr.mxu0 0.0
  %1436 = vmatpush1.msra.mxu0 0.0
  %1437 = vmatprep.subr.mxu0 0.0
  %1438 = vmatpush1.msra.mxu0 0.0
  %1439 = vmatprep.subr.mxu0 0.0
  %1440 = vmatpush1.msra.mxu0 0.0
  %1441 = vmatprep.subr.mxu0 0.0
  %1442 = vmatpush1.msra.mxu0 0.0
  %1443 = vmatprep.mubr.f32.mxu0 0.0
  %1444 = vmatmul.mubr.f32.gmra.mrb[0].mxu0 %v1377
  %v1445 = vpop.f32.mrb[0].mxu0
  %v1446 = vadd.f32 %v447, %v1445
  %v1447 = vpop.f32.mrb[0].mxu0
  %1448 = vdwg.mxu0
  %v1449 = vtanh.pop %v1446
  %v1450 = vld [vmem:[#allocation2 + $0x38] sm:$0xff]
  %v1452 = vsel %vm286, %v1370, 0
  %1454 = vmatprep.subr.mxu0 0.0
  %1455 = vmatpush1.msra.mxu0 %v23
  %1456 = vmatprep.subr.mxu0 0.0
  %1457 = vmatpush1.msra.mxu0 %v24
  %1458 = vmatprep.subr.mxu0 0.0
  %1459 = vmatpush1.msra.mxu0 %v25
  %1460 = vmatprep.subr.mxu0 0.0
  %1461 = vmatpush1.msra.mxu0 %v26
  %1462 = vmatprep.subr.mxu0 0.0
  %1463 = vmatpush1.msra.mxu0 0.0
  %1464 = vmatprep.subr.mxu0 0.0
  %1465 = vmatpush1.msra.mxu0 0.0
  %1466 = vmatprep.subr.mxu0 0.0
  %1467 = vmatpush1.msra.mxu0 0.0
  %1468 = vmatprep.subr.mxu0 0.0
  %1469 = vmatpush1.msra.mxu0 0.0
  %1470 = vmatprep.subr.mxu0 0.0
  %1471 = vmatpush1.msra.mxu0 0.0
  %1472 = vmatprep.subr.mxu0 0.0
  %1473 = vmatpush1.msra.mxu0 0.0
  %1474 = vmatprep.subr.mxu0 0.0
  %1475 = vmatpush1.msra.mxu0 0.0
  %1476 = vmatprep.subr.mxu0 0.0
  %1477 = vmatpush1.msra.mxu0 0.0
  %1478 = vmatprep.subr.mxu0 0.0
  %1479 = vmatpush1.msra.mxu0 0.0
  %1480 = vmatprep.subr.mxu0 0.0
  %1481 = vmatpush1.msra.mxu0 0.0
  %1482 = vmatprep.subr.mxu0 0.0
  %1483 = vmatpush1.msra.mxu0 0.0
  %1484 = vmatprep.subr.mxu0 0.0
  %1485 = vmatpush1.msra.mxu0 0.0
  %1486 = vmatprep.subr.mxu0 0.0
  %1487 = vmatpush1.msra.mxu0 0.0
  %1488 = vmatprep.subr.mxu0 0.0
  %1489 = vmatpush1.msra.mxu0 0.0
  %1490 = vmatprep.subr.mxu0 0.0
  %1491 = vmatpush1.msra.mxu0 0.0
  %1492 = vmatprep.subr.mxu0 0.0
  %1493 = vmatpush1.msra.mxu0 0.0
  %1494 = vmatprep.subr.mxu0 0.0
  %1495 = vmatpush1.msra.mxu0 0.0
  %1496 = vmatprep.subr.mxu0 0.0
  %1497 = vmatpush1.msra.mxu0 0.0
  %1498 = vmatprep.subr.mxu0 0.0
  %1499 = vmatpush1.msra.mxu0 0.0
  %1500 = vmatprep.subr.mxu0 0.0
  %1501 = vmatpush1.msra.mxu0 0.0
  %1502 = vmatprep.subr.mxu0 0.0
  %1503 = vmatpush1.msra.mxu0 0.0
  %1504 = vmatprep.subr.mxu0 0.0
  %1505 = vmatpush1.msra.mxu0 0.0
  %1506 = vmatprep.subr.mxu0 0.0
  %1507 = vmatpush1.msra.mxu0 0.0
  %1508 = vmatprep.subr.mxu0 0.0
  %1509 = vmatpush1.msra.mxu0 0.0
  %1510 = vmatprep.subr.mxu0 0.0
  %1511 = vmatpush1.msra.mxu0 0.0
  %1512 = vmatprep.subr.mxu0 0.0
  %1513 = vmatpush1.msra.mxu0 0.0
  %1514 = vmatprep.subr.mxu0 0.0
  %1515 = vmatpush1.msra.mxu0 0.0
  %1516 = vmatprep.subr.mxu0 0.0
  %1517 = vmatpush1.msra.mxu0 0.0
  %1518 = vmatprep.mubr.f32.mxu0 0.0
  %1519 = vmatmul.mubr.f32.gmra.mrb[0].mxu0 %v1452
  %v1520 = vpop.f32.mrb[0].mxu0
  %v1521 = vadd.f32 0.0, %v1520
  %v1522 = vpop.f32.mrb[0].mxu0
  %1523 = vdwg.mxu0
  %v1524 = vadd.f32 %v1450, %v1521
  %v1525 = vtanh.pop %v1524
  %1527 = vrot.lane.b32.xlu0 %v1449, 32
  %v1528 = vpop.permute.xlu0 %1527
  %v1530 = vsel %vm286, %v1525, %v1528
  %v1532 = vsel %vm600, %v1530, 0
  %1534 = vmatprep.subr.mxu0 0.0
  %1535 = vmatpush1.msra.mxu0 %v27
  %1536 = vmatprep.subr.mxu0 0.0
  %1537 = vmatpush1.msra.mxu0 %v28
  %1538 = vmatprep.subr.mxu0 0.0
  %1539 = vmatpush1.msra.mxu0 %v29
  %1540 = vmatprep.subr.mxu0 0.0
  %1541 = vmatpush1.msra.mxu0 %v30
  %1542 = vmatprep.subr.mxu0 0.0
  %1543 = vmatpush1.msra.mxu0 %v31
  %1544 = vmatprep.subr.mxu0 0.0
  %1545 = vmatpush1.msra.mxu0 %v32
  %1546 = vmatprep.subr.mxu0 0.0
  %1547 = vmatpush1.msra.mxu0 %v33
  %1548 = vmatprep.subr.mxu0 0.0
  %1549 = vmatpush1.msra.mxu0 %v34
  %1550 = vmatprep.subr.mxu0 0.0
  %1551 = vmatpush1.msra.mxu0 0.0
  %1552 = vmatprep.subr.mxu0 0.0
  %1553 = vmatpush1.msra.mxu0 0.0
  %1554 = vmatprep.subr.mxu0 0.0
  %1555 = vmatpush1.msra.mxu0 0.0
  %1556 = vmatprep.subr.mxu0 0.0
  %1557 = vmatpush1.msra.mxu0 0.0
  %1558 = vmatprep.subr.mxu0 0.0
  %1559 = vmatpush1.msra.mxu0 0.0
  %1560 = vmatprep.subr.mxu0 0.0
  %1561 = vmatpush1.msra.mxu0 0.0
  %1562 = vmatprep.subr.mxu0 0.0
  %1563 = vmatpush1.msra.mxu0 0.0
  %1564 = vmatprep.subr.mxu0 0.0
  %1565 = vmatpush1.msra.mxu0 0.0
  %1566 = vmatprep.subr.mxu0 0.0
  %1567 = vmatpush1.msra.mxu0 0.0
  %1568 = vmatprep.subr.mxu0 0.0
  %1569 = vmatpush1.msra.mxu0 0.0
  %1570 = vmatprep.subr.mxu0 0.0
  %1571 = vmatpush1.msra.mxu0 0.0
  %1572 = vmatprep.subr.mxu0 0.0
  %1573 = vmatpush1.msra.mxu0 0.0
  %1574 = vmatprep.subr.mxu0 0.0
  %1575 = vmatpush1.msra.mxu0 0.0
  %1576 = vmatprep.subr.mxu0 0.0
  %1577 = vmatpush1.msra.mxu0 0.0
  %1578 = vmatprep.subr.mxu0 0.0
  %1579 = vmatpush1.msra.mxu0 0.0
  %1580 = vmatprep.subr.mxu0 0.0
  %1581 = vmatpush1.msra.mxu0 0.0
  %1582 = vmatprep.subr.mxu0 0.0
  %1583 = vmatpush1.msra.mxu0 0.0
  %1584 = vmatprep.subr.mxu0 0.0
  %1585 = vmatpush1.msra.mxu0 0.0
  %1586 = vmatprep.subr.mxu0 0.0
  %1587 = vmatpush1.msra.mxu0 0.0
  %1588 = vmatprep.subr.mxu0 0.0
  %1589 = vmatpush1.msra.mxu0 0.0
  %1590 = vmatprep.subr.mxu0 0.0
  %1591 = vmatpush1.msra.mxu0 0.0
  %1592 = vmatprep.subr.mxu0 0.0
  %1593 = vmatpush1.msra.mxu0 0.0
  %1594 = vmatprep.subr.mxu0 0.0
  %1595 = vmatpush1.msra.mxu0 0.0
  %1596 = vmatprep.subr.mxu0 0.0
  %1597 = vmatpush1.msra.mxu0 0.0
  %1598 = vmatprep.mubr.f32.mxu0 0.0
  %1599 = vmatmul.mubr.f32.gmra.mrb[0].mxu0 %v1532
  %v1600 = vpop.f32.mrb[0].mxu0
  %v1601 = vadd.f32 %v447, %v1600
  %v1602 = vpop.f32.mrb[0].mxu0
  %1603 = vdwg.mxu0
  %v1604 = vtanh.pop %v1601
  %v1605 = vld [vmem:[#allocation2 + $0x40] sm:$0xff]
  %v1607 = vsel %vm286, %v1525, 0
  %1609 = vmatprep.subr.mxu0 0.0
  %1610 = vmatpush1.msra.mxu0 %v23
  %1611 = vmatprep.subr.mxu0 0.0
  %1612 = vmatpush1.msra.mxu0 %v24
  %1613 = vmatprep.subr.mxu0 0.0
  %1614 = vmatpush1.msra.mxu0 %v25
  %1615 = vmatprep.subr.mxu0 0.0
  %1616 = vmatpush1.msra.mxu0 %v26
  %1617 = vmatprep.subr.mxu0 0.0
  %1618 = vmatpush1.msra.mxu0 0.0
  %1619 = vmatprep.subr.mxu0 0.0
  %1620 = vmatpush1.msra.mxu0 0.0
  %1621 = vmatprep.subr.mxu0 0.0
  %1622 = vmatpush1.msra.mxu0 0.0
  %1623 = vmatprep.subr.mxu0 0.0
  %1624 = vmatpush1.msra.mxu0 0.0
  %1625 = vmatprep.subr.mxu0 0.0
  %1626 = vmatpush1.msra.mxu0 0.0
  %1627 = vmatprep.subr.mxu0 0.0
  %1628 = vmatpush1.msra.mxu0 0.0
  %1629 = vmatprep.subr.mxu0 0.0
  %1630 = vmatpush1.msra.mxu0 0.0
  %1631 = vmatprep.subr.mxu0 0.0
  %1632 = vmatpush1.msra.mxu0 0.0
  %1633 = vmatprep.subr.mxu0 0.0
  %1634 = vmatpush1.msra.mxu0 0.0
  %1635 = vmatprep.subr.mxu0 0.0
  %1636 = vmatpush1.msra.mxu0 0.0
  %1637 = vmatprep.subr.mxu0 0.0
  %1638 = vmatpush1.msra.mxu0 0.0
  %1639 = vmatprep.subr.mxu0 0.0
  %1640 = vmatpush1.msra.mxu0 0.0
  %1641 = vmatprep.subr.mxu0 0.0
  %1642 = vmatpush1.msra.mxu0 0.0
  %1643 = vmatprep.subr.mxu0 0.0
  %1644 = vmatpush1.msra.mxu0 0.0
  %1645 = vmatprep.subr.mxu0 0.0
  %1646 = vmatpush1.msra.mxu0 0.0
  %1647 = vmatprep.subr.mxu0 0.0
  %1648 = vmatpush1.msra.mxu0 0.0
  %1649 = vmatprep.subr.mxu0 0.0
  %1650 = vmatpush1.msra.mxu0 0.0
  %1651 = vmatprep.subr.mxu0 0.0
  %1652 = vmatpush1.msra.mxu0 0.0
  %1653 = vmatprep.subr.mxu0 0.0
  %1654 = vmatpush1.msra.mxu0 0.0
  %1655 = vmatprep.subr.mxu0 0.0
  %1656 = vmatpush1.msra.mxu0 0.0
  %1657 = vmatprep.subr.mxu0 0.0
  %1658 = vmatpush1.msra.mxu0 0.0
  %1659 = vmatprep.subr.mxu0 0.0
  %1660 = vmatpush1.msra.mxu0 0.0
  %1661 = vmatprep.subr.mxu0 0.0
  %1662 = vmatpush1.msra.mxu0 0.0
  %1663 = vmatprep.subr.mxu0 0.0
  %1664 = vmatpush1.msra.mxu0 0.0
  %1665 = vmatprep.subr.mxu0 0.0
  %1666 = vmatpush1.msra.mxu0 0.0
  %1667 = vmatprep.subr.mxu0 0.0
  %1668 = vmatpush1.msra.mxu0 0.0
  %1669 = vmatprep.subr.mxu0 0.0
  %1670 = vmatpush1.msra.mxu0 0.0
  %1671 = vmatprep.subr.mxu0 0.0
  %1672 = vmatpush1.msra.mxu0 0.0
  %1673 = vmatprep.mubr.f32.mxu0 0.0
  %1674 = vmatmul.mubr.f32.gmra.mrb[0].mxu0 %v1607
  %v1675 = vpop.f32.mrb[0].mxu0
  %v1676 = vadd.f32 0.0, %v1675
  %v1677 = vpop.f32.mrb[0].mxu0
  %1678 = vdwg.mxu0
  %v1679 = vadd.f32 %v1605, %v1676
  %v1680 = vtanh.pop %v1679
  %1682 = vrot.lane.b32.xlu0 %v1604, 32
  %v1683 = vpop.permute.xlu0 %1682
  %v1685 = vsel %vm286, %v1680, %v1683
  %v1687 = vsel %vm600, %v1685, 0
  %1689 = vmatprep.subr.mxu0 0.0
  %1690 = vmatpush1.msra.mxu0 %v27
  %1691 = vmatprep.subr.mxu0 0.0
  %1692 = vmatpush1.msra.mxu0 %v28
  %1693 = vmatprep.subr.mxu0 0.0
  %1694 = vmatpush1.msra.mxu0 %v29
  %1695 = vmatprep.subr.mxu0 0.0
  %1696 = vmatpush1.msra.mxu0 %v30
  %1697 = vmatprep.subr.mxu0 0.0
  %1698 = vmatpush1.msra.mxu0 %v31
  %1699 = vmatprep.subr.mxu0 0.0
  %1700 = vmatpush1.msra.mxu0 %v32
  %1701 = vmatprep.subr.mxu0 0.0
  %1702 = vmatpush1.msra.mxu0 %v33
  %1703 = vmatprep.subr.mxu0 0.0
  %1704 = vmatpush1.msra.mxu0 %v34
  %1705 = vmatprep.subr.mxu0 0.0
  %1706 = vmatpush1.msra.mxu0 0.0
  %1707 = vmatprep.subr.mxu0 0.0
  %1708 = vmatpush1.msra.mxu0 0.0
  %1709 = vmatprep.subr.mxu0 0.0
  %1710 = vmatpush1.msra.mxu0 0.0
  %1711 = vmatprep.subr.mxu0 0.0
  %1712 = vmatpush1.msra.mxu0 0.0
  %1713 = vmatprep.subr.mxu0 0.0
  %1714 = vmatpush1.msra.mxu0 0.0
  %1715 = vmatprep.subr.mxu0 0.0
  %1716 = vmatpush1.msra.mxu0 0.0
  %1717 = vmatprep.subr.mxu0 0.0
  %1718 = vmatpush1.msra.mxu0 0.0
  %1719 = vmatprep.subr.mxu0 0.0
  %1720 = vmatpush1.msra.mxu0 0.0
  %1721 = vmatprep.subr.mxu0 0.0
  %1722 = vmatpush1.msra.mxu0 0.0
  %1723 = vmatprep.subr.mxu0 0.0
  %1724 = vmatpush1.msra.mxu0 0.0
  %1725 = vmatprep.subr.mxu0 0.0
  %1726 = vmatpush1.msra.mxu0 0.0
  %1727 = vmatprep.subr.mxu0 0.0
  %1728 = vmatpush1.msra.mxu0 0.0
  %1729 = vmatprep.subr.mxu0 0.0
  %1730 = vmatpush1.msra.mxu0 0.0
  %1731 = vmatprep.subr.mxu0 0.0
  %1732 = vmatpush1.msra.mxu0 0.0
  %1733 = vmatprep.subr.mxu0 0.0
  %1734 = vmatpush1.msra.mxu0 0.0
  %1735 = vmatprep.subr.mxu0 0.0
  %1736 = vmatpush1.msra.mxu0 0.0
  %1737 = vmatprep.subr.mxu0 0.0
  %1738 = vmatpush1.msra.mxu0 0.0
  %1739 = vmatprep.subr.mxu0 0.0
  %1740 = vmatpush1.msra.mxu0 0.0
  %1741 = vmatprep.subr.mxu0 0.0
  %1742 = vmatpush1.msra.mxu0 0.0
  %1743 = vmatprep.subr.mxu0 0.0
  %1744 = vmatpush1.msra.mxu0 0.0
  %1745 = vmatprep.subr.mxu0 0.0
  %1746 = vmatpush1.msra.mxu0 0.0
  %1747 = vmatprep.subr.mxu0 0.0
  %1748 = vmatpush1.msra.mxu0 0.0
  %1749 = vmatprep.subr.mxu0 0.0
  %1750 = vmatpush1.msra.mxu0 0.0
  %1751 = vmatprep.subr.mxu0 0.0
  %1752 = vmatpush1.msra.mxu0 0.0
  %1753 = vmatprep.mubr.f32.mxu0 0.0
  %1754 = vmatmul.mubr.f32.gmra.mrb[0].mxu0 %v1687
  %v1755 = vpop.f32.mrb[0].mxu0
  %v1756 = vadd.f32 %v447, %v1755
  %v1757 = vpop.f32.mrb[0].mxu0
  %1758 = vdwg.mxu0
  %v1759 = vtanh.pop %v1756
  %v1760 = vld [vmem:[#allocation2 + $0x48] sm:$0xff]
  %v1762 = vsel %vm286, %v1680, 0
  %1764 = vmatprep.subr.mxu0 0.0
  %1765 = vmatpush1.msra.mxu0 %v23
  %1766 = vmatprep.subr.mxu0 0.0
  %1767 = vmatpush1.msra.mxu0 %v24
  %1768 = vmatprep.subr.mxu0 0.0
  %1769 = vmatpush1.msra.mxu0 %v25
  %1770 = vmatprep.subr.mxu0 0.0
  %1771 = vmatpush1.msra.mxu0 %v26
  %1772 = vmatprep.subr.mxu0 0.0
  %1773 = vmatpush1.msra.mxu0 0.0
  %1774 = vmatprep.subr.mxu0 0.0
  %1775 = vmatpush1.msra.mxu0 0.0
  %1776 = vmatprep.subr.mxu0 0.0
  %1777 = vmatpush1.msra.mxu0 0.0
  %1778 = vmatprep.subr.mxu0 0.0
  %1779 = vmatpush1.msra.mxu0 0.0
  %1780 = vmatprep.subr.mxu0 0.0
  %1781 = vmatpush1.msra.mxu0 0.0
  %1782 = vmatprep.subr.mxu0 0.0
  %1783 = vmatpush1.msra.mxu0 0.0
  %1784 = vmatprep.subr.mxu0 0.0
  %1785 = vmatpush1.msra.mxu0 0.0
  %1786 = vmatprep.subr.mxu0 0.0
  %1787 = vmatpush1.msra.mxu0 0.0
  %1788 = vmatprep.subr.mxu0 0.0
  %1789 = vmatpush1.msra.mxu0 0.0
  %1790 = vmatprep.subr.mxu0 0.0
  %1791 = vmatpush1.msra.mxu0 0.0
  %1792 = vmatprep.subr.mxu0 0.0
  %1793 = vmatpush1.msra.mxu0 0.0
  %1794 = vmatprep.subr.mxu0 0.0
  %1795 = vmatpush1.msra.mxu0 0.0
  %1796 = vmatprep.subr.mxu0 0.0
  %1797 = vmatpush1.msra.mxu0 0.0
  %1798 = vmatprep.subr.mxu0 0.0
  %1799 = vmatpush1.msra.mxu0 0.0
  %1800 = vmatprep.subr.mxu0 0.0
  %1801 = vmatpush1.msra.mxu0 0.0
  %1802 = vmatprep.subr.mxu0 0.0
  %1803 = vmatpush1.msra.mxu0 0.0
  %1804 = vmatprep.subr.mxu0 0.0
  %1805 = vmatpush1.msra.mxu0 0.0
  %1806 = vmatprep.subr.mxu0 0.0
  %1807 = vmatpush1.msra.mxu0 0.0
  %1808 = vmatprep.subr.mxu0 0.0
  %1809 = vmatpush1.msra.mxu0 0.0
  %1810 = vmatprep.subr.mxu0 0.0
  %1811 = vmatpush1.msra.mxu0 0.0
  %1812 = vmatprep.subr.mxu0 0.0
  %1813 = vmatpush1.msra.mxu0 0.0
  %1814 = vmatprep.subr.mxu0 0.0
  %1815 = vmatpush1.msra.mxu0 0.0
  %1816 = vmatprep.subr.mxu0 0.0
  %1817 = vmatpush1.msra.mxu0 0.0
  %1818 = vmatprep.subr.mxu0 0.0
  %1819 = vmatpush1.msra.mxu0 0.0
  %1820 = vmatprep.subr.mxu0 0.0
  %1821 = vmatpush1.msra.mxu0 0.0
  %1822 = vmatprep.subr.mxu0 0.0
  %1823 = vmatpush1.msra.mxu0 0.0
  %1824 = vmatprep.subr.mxu0 0.0
  %1825 = vmatpush1.msra.mxu0 0.0
  %1826 = vmatprep.subr.mxu0 0.0
  %1827 = vmatpush1.msra.mxu0 0.0
  %1828 = vmatprep.mubr.f32.mxu0 0.0
  %1829 = vmatmul.mubr.f32.gmra.mrb[0].mxu0 %v1762
  %v1830 = vpop.f32.mrb[0].mxu0
  %v1831 = vadd.f32 0.0, %v1830
  %v1832 = vpop.f32.mrb[0].mxu0
  %1833 = vdwg.mxu0
  %v1834 = vadd.f32 %v1760, %v1831
  %v1835 = vtanh.pop %v1834
  %1837 = vrot.lane.b32.xlu0 %v1759, 32
  %v1838 = vpop.permute.xlu0 %1837
  %v1840 = vsel %vm286, %v1835, %v1838
  %v1842 = vsel %vm600, %v1840, 0
  %1844 = vmatprep.subr.mxu0 0.0
  %1845 = vmatpush1.msra.mxu0 %v27
  %1846 = vmatprep.subr.mxu0 0.0
  %1847 = vmatpush1.msra.mxu0 %v28
  %1848 = vmatprep.subr.mxu0 0.0
  %1849 = vmatpush1.msra.mxu0 %v29
  %1850 = vmatprep.subr.mxu0 0.0
  %1851 = vmatpush1.msra.mxu0 %v30
  %1852 = vmatprep.subr.mxu0 0.0
  %1853 = vmatpush1.msra.mxu0 %v31
  %1854 = vmatprep.subr.mxu0 0.0
  %1855 = vmatpush1.msra.mxu0 %v32
  %1856 = vmatprep.subr.mxu0 0.0
  %1857 = vmatpush1.msra.mxu0 %v33
  %1858 = vmatprep.subr.mxu0 0.0
  %1859 = vmatpush1.msra.mxu0 %v34
  %1860 = vmatprep.subr.mxu0 0.0
  %1861 = vmatpush1.msra.mxu0 0.0
  %1862 = vmatprep.subr.mxu0 0.0
  %1863 = vmatpush1.msra.mxu0 0.0
  %1864 = vmatprep.subr.mxu0 0.0
  %1865 = vmatpush1.msra.mxu0 0.0
  %1866 = vmatprep.subr.mxu0 0.0
  %1867 = vmatpush1.msra.mxu0 0.0
  %1868 = vmatprep.subr.mxu0 0.0
  %1869 = vmatpush1.msra.mxu0 0.0
  %1870 = vmatprep.subr.mxu0 0.0
  %1871 = vmatpush1.msra.mxu0 0.0
  %1872 = vmatprep.subr.mxu0 0.0
  %1873 = vmatpush1.msra.mxu0 0.0
  %1874 = vmatprep.subr.mxu0 0.0
  %1875 = vmatpush1.msra.mxu0 0.0
  %1876 = vmatprep.subr.mxu0 0.0
  %1877 = vmatpush1.msra.mxu0 0.0
  %1878 = vmatprep.subr.mxu0 0.0
  %1879 = vmatpush1.msra.mxu0 0.0
  %1880 = vmatprep.subr.mxu0 0.0
  %1881 = vmatpush1.msra.mxu0 0.0
  %1882 = vmatprep.subr.mxu0 0.0
  %1883 = vmatpush1.msra.mxu0 0.0
  %1884 = vmatprep.subr.mxu0 0.0
  %1885 = vmatpush1.msra.mxu0 0.0
  %1886 = vmatprep.subr.mxu0 0.0
  %1887 = vmatpush1.msra.mxu0 0.0
  %1888 = vmatprep.subr.mxu0 0.0
  %1889 = vmatpush1.msra.mxu0 0.0
  %1890 = vmatprep.subr.mxu0 0.0
  %1891 = vmatpush1.msra.mxu0 0.0
  %1892 = vmatprep.subr.mxu0 0.0
  %1893 = vmatpush1.msra.mxu0 0.0
  %1894 = vmatprep.subr.mxu0 0.0
  %1895 = vmatpush1.msra.mxu0 0.0
  %1896 = vmatprep.subr.mxu0 0.0
  %1897 = vmatpush1.msra.mxu0 0.0
  %1898 = vmatprep.subr.mxu0 0.0
  %1899 = vmatpush1.msra.mxu0 0.0
  %1900 = vmatprep.subr.mxu0 0.0
  %1901 = vmatpush1.msra.mxu0 0.0
  %1902 = vmatprep.subr.mxu0 0.0
  %1903 = vmatpush1.msra.mxu0 0.0
  %1904 = vmatprep.subr.mxu0 0.0
  %1905 = vmatpush1.msra.mxu0 0.0
  %1906 = vmatprep.subr.mxu0 0.0
  %1907 = vmatpush1.msra.mxu0 0.0
  %1908 = vmatprep.mubr.f32.mxu0 0.0
  %1909 = vmatmul.mubr.f32.gmra.mrb[0].mxu0 %v1842
  %v1910 = vpop.f32.mrb[0].mxu0
  %v1911 = vadd.f32 %v447, %v1910
  %v1912 = vpop.f32.mrb[0].mxu0
  %1913 = vdwg.mxu0
  %v1914 = vtanh.pop %v1911
  %v1915 = vld [vmem:[%s1] sm:$0xff]
  %v1917 = vsel %vm286, %v1915, 0
  %1919 = vmatprep.subr.mxu0 0.0
  %1920 = vmatpush1.msra.mxu0 %v39
  %1921 = vmatprep.subr.mxu0 0.0
  %1922 = vmatpush1.msra.mxu0 %v40
  %1923 = vmatprep.subr.mxu0 0.0
  %1924 = vmatpush1.msra.mxu0 %v41
  %1925 = vmatprep.subr.mxu0 0.0
  %1926 = vmatpush1.msra.mxu0 %v42
  %1927 = vmatprep.subr.mxu0 0.0
  %1928 = vmatpush1.msra.mxu0 0.0
  %1929 = vmatprep.subr.mxu0 0.0
  %1930 = vmatpush1.msra.mxu0 0.0
  %1931 = vmatprep.subr.mxu0 0.0
  %1932 = vmatpush1.msra.mxu0 0.0
  %1933 = vmatprep.subr.mxu0 0.0
  %1934 = vmatpush1.msra.mxu0 0.0
  %1935 = vmatprep.subr.mxu0 0.0
  %1936 = vmatpush1.msra.mxu0 0.0
  %1937 = vmatprep.subr.mxu0 0.0
  %1938 = vmatpush1.msra.mxu0 0.0
  %1939 = vmatprep.subr.mxu0 0.0
  %1940 = vmatpush1.msra.mxu0 0.0
  %1941 = vmatprep.subr.mxu0 0.0
  %1942 = vmatpush1.msra.mxu0 0.0
  %1943 = vmatprep.subr.mxu0 0.0
  %1944 = vmatpush1.msra.mxu0 0.0
  %1945 = vmatprep.subr.mxu0 0.0
  %1946 = vmatpush1.msra.mxu0 0.0
  %1947 = vmatprep.subr.mxu0 0.0
  %1948 = vmatpush1.msra.mxu0 0.0
  %1949 = vmatprep.subr.mxu0 0.0
  %1950 = vmatpush1.msra.mxu0 0.0
  %1951 = vmatprep.subr.mxu0 0.0
  %1952 = vmatpush1.msra.mxu0 0.0
  %1953 = vmatprep.subr.mxu0 0.0
  %1954 = vmatpush1.msra.mxu0 0.0
  %1955 = vmatprep.subr.mxu0 0.0
  %1956 = vmatpush1.msra.mxu0 0.0
  %1957 = vmatprep.subr.mxu0 0.0
  %1958 = vmatpush1.msra.mxu0 0.0
  %1959 = vmatprep.subr.mxu0 0.0
  %1960 = vmatpush1.msra.mxu0 0.0
  %1961 = vmatprep.subr.mxu0 0.0
  %1962 = vmatpush1.msra.mxu0 0.0
  %1963 = vmatprep.subr.mxu0 0.0
  %1964 = vmatpush1.msra.mxu0 0.0
  %1965 = vmatprep.subr.mxu0 0.0
  %1966 = vmatpush1.msra.mxu0 0.0
  %1967 = vmatprep.subr.mxu0 0.0
  %1968 = vmatpush1.msra.mxu0 0.0
  %1969 = vmatprep.subr.mxu0 0.0
  %1970 = vmatpush1.msra.mxu0 0.0
  %1971 = vmatprep.subr.mxu0 0.0
  %1972 = vmatpush1.msra.mxu0 0.0
  %1973 = vmatprep.subr.mxu0 0.0
  %1974 = vmatpush1.msra.mxu0 0.0
  %1975 = vmatprep.subr.mxu0 0.0
  %1976 = vmatpush1.msra.mxu0 0.0
  %1977 = vmatprep.subr.mxu0 0.0
  %1978 = vmatpush1.msra.mxu0 0.0
  %1979 = vmatprep.subr.mxu0 0.0
  %1980 = vmatpush1.msra.mxu0 0.0
  %1981 = vmatprep.subr.mxu0 0.0
  %1982 = vmatpush1.msra.mxu0 0.0
  %1983 = vmatprep.mubr.f32.mxu0 0.0
  %1984 = vmatmul.mubr.f32.gmra.mrb[0].mxu0 %v1917
  %v1985 = vpop.f32.mrb[0].mxu0
  %v1986 = vadd.f32 0.0, %v1985
  %v1987 = vpop.f32.mrb[0].mxu0
  %1988 = vdwg.mxu0
  %v1990 = vsel %vm286, %v1914, 0
  %1992 = vmatprep.subr.mxu0 0.0
  %1993 = vmatpush1.msra.mxu0 %v35
  %1994 = vmatprep.subr.mxu0 0.0
  %1995 = vmatpush1.msra.mxu0 %v36
  %1996 = vmatprep.subr.mxu0 0.0
  %1997 = vmatpush1.msra.mxu0 %v37
  %1998 = vmatprep.subr.mxu0 0.0
  %1999 = vmatpush1.msra.mxu0 %v38
  %2000 = vmatprep.subr.mxu0 0.0
  %2001 = vmatpush1.msra.mxu0 0.0
  %2002 = vmatprep.subr.mxu0 0.0
  %2003 = vmatpush1.msra.mxu0 0.0
  %2004 = vmatprep.subr.mxu0 0.0
  %2005 = vmatpush1.msra.mxu0 0.0
  %2006 = vmatprep.subr.mxu0 0.0
  %2007 = vmatpush1.msra.mxu0 0.0
  %2008 = vmatprep.subr.mxu0 0.0
  %2009 = vmatpush1.msra.mxu0 0.0
  %2010 = vmatprep.subr.mxu0 0.0
  %2011 = vmatpush1.msra.mxu0 0.0
  %2012 = vmatprep.subr.mxu0 0.0
  %2013 = vmatpush1.msra.mxu0 0.0
  %2014 = vmatprep.subr.mxu0 0.0
  %2015 = vmatpush1.msra.mxu0 0.0
  %2016 = vmatprep.subr.mxu0 0.0
  %2017 = vmatpush1.msra.mxu0 0.0
  %2018 = vmatprep.subr.mxu0 0.0
  %2019 = vmatpush1.msra.mxu0 0.0
  %2020 = vmatprep.subr.mxu0 0.0
  %2021 = vmatpush1.msra.mxu0 0.0
  %2022 = vmatprep.subr.mxu0 0.0
  %2023 = vmatpush1.msra.mxu0 0.0
  %2024 = vmatprep.subr.mxu0 0.0
  %2025 = vmatpush1.msra.mxu0 0.0
  %2026 = vmatprep.subr.mxu0 0.0
  %2027 = vmatpush1.msra.mxu0 0.0
  %2028 = vmatprep.subr.mxu0 0.0
  %2029 = vmatpush1.msra.mxu0 0.0
  %2030 = vmatprep.subr.mxu0 0.0
  %2031 = vmatpush1.msra.mxu0 0.0
  %2032 = vmatprep.subr.mxu0 0.0
  %2033 = vmatpush1.msra.mxu0 0.0
  %2034 = vmatprep.subr.mxu0 0.0
  %2035 = vmatpush1.msra.mxu0 0.0
  %2036 = vmatprep.subr.mxu0 0.0
  %2037 = vmatpush1.msra.mxu0 0.0
  %2038 = vmatprep.subr.mxu0 0.0
  %2039 = vmatpush1.msra.mxu0 0.0
  %2040 = vmatprep.subr.mxu0 0.0
  %2041 = vmatpush1.msra.mxu0 0.0
  %2042 = vmatprep.subr.mxu0 0.0
  %2043 = vmatpush1.msra.mxu0 0.0
  %2044 = vmatprep.subr.mxu0 0.0
  %2045 = vmatpush1.msra.mxu0 0.0
  %2046 = vmatprep.subr.mxu0 0.0
  %2047 = vmatpush1.msra.mxu0 0.0
  %2048 = vmatprep.subr.mxu0 0.0
  %2049 = vmatpush1.msra.mxu0 0.0
  %2050 = vmatprep.subr.mxu0 0.0
  %2051 = vmatpush1.msra.mxu0 0.0
  %2052 = vmatprep.subr.mxu0 0.0
  %2053 = vmatpush1.msra.mxu0 0.0
  %2054 = vmatprep.subr.mxu0 0.0
  %2055 = vmatpush1.msra.mxu0 0.0
  %2056 = vmatprep.mubr.f32.mxu0 0.0
  %2057 = vmatmul.mubr.f32.gmra.mrb[0].mxu0 %v1990
  %v2058 = vpop.f32.mrb[0].mxu0
  %v2059 = vadd.f32 %v1986, %v2058
  %v2060 = vpop.f32.mrb[0].mxu0
  %2061 = vdwg.mxu0
  %v2062 = vlaneseq
  %v2063 = vshrl.u32 %v2062, 7
  %v2064 = vsub.s32 0, %v2063
  %v2065 = vrot.slane %v50, %v2064
  %v2066 = vadd.f32 %v2059, %v2065
  %v2067 = vsub.f32 0.0, %v2066
  %v2068 = vmul.f32 %v2067, 1.442695
  %v2069 = vpow.pop %v2068
  %v2070 = vadd.f32 %v2069, 1.0
  %v2071 = vrcp.pop %v2070
  %v2072 = vmul.f32 1.0, %v2071
  %v2073 = vmul.f32 %v2066, %v2072
  %v2074 = vlaneseq
  %v2075 = vshrl.u32 %v2074, 7
  %v2076 = vsub.s32 0, %v2075
  %v2077 = vrot.slane %v51, %v2076
  %v2079 = vsel %vm286, %v2073, 0
  %2081 = vmatprep.subr.mxu0 0.0
  %2082 = vmatpush1.msra.mxu0 %v43
  %2083 = vmatprep.subr.mxu0 0.0
  %2084 = vmatpush1.msra.mxu0 %v44
  %2085 = vmatprep.subr.mxu0 0.0
  %2086 = vmatpush1.msra.mxu0 %v45
  %2087 = vmatprep.subr.mxu0 0.0
  %2088 = vmatpush1.msra.mxu0 %v46
  %2089 = vmatprep.subr.mxu0 0.0
  %2090 = vmatpush1.msra.mxu0 0.0
  %2091 = vmatprep.subr.mxu0 0.0
  %2092 = vmatpush1.msra.mxu0 0.0
  %2093 = vmatprep.subr.mxu0 0.0
  %2094 = vmatpush1.msra.mxu0 0.0
  %2095 = vmatprep.subr.mxu0 0.0
  %2096 = vmatpush1.msra.mxu0 0.0
  %2097 = vmatprep.subr.mxu0 0.0
  %2098 = vmatpush1.msra.mxu0 0.0
  %2099 = vmatprep.subr.mxu0 0.0
  %2100 = vmatpush1.msra.mxu0 0.0
  %2101 = vmatprep.subr.mxu0 0.0
  %2102 = vmatpush1.msra.mxu0 0.0
  %2103 = vmatprep.subr.mxu0 0.0
  %2104 = vmatpush1.msra.mxu0 0.0
  %2105 = vmatprep.subr.mxu0 0.0
  %2106 = vmatpush1.msra.mxu0 0.0
  %2107 = vmatprep.subr.mxu0 0.0
  %2108 = vmatpush1.msra.mxu0 0.0
  %2109 = vmatprep.subr.mxu0 0.0
  %2110 = vmatpush1.msra.mxu0 0.0
  %2111 = vmatprep.subr.mxu0 0.0
  %2112 = vmatpush1.msra.mxu0 0.0
  %2113 = vmatprep.subr.mxu0 0.0
  %2114 = vmatpush1.msra.mxu0 0.0
  %2115 = vmatprep.subr.mxu0 0.0
  %2116 = vmatpush1.msra.mxu0 0.0
  %2117 = vmatprep.subr.mxu0 0.0
  %2118 = vmatpush1.msra.mxu0 0.0
  %2119 = vmatprep.subr.mxu0 0.0
  %2120 = vmatpush1.msra.mxu0 0.0
  %2121 = vmatprep.subr.mxu0 0.0
  %2122 = vmatpush1.msra.mxu0 0.0
  %2123 = vmatprep.subr.mxu0 0.0
  %2124 = vmatpush1.msra.mxu0 0.0
  %2125 = vmatprep.subr.mxu0 0.0
  %2126 = vmatpush1.msra.mxu0 0.0
  %2127 = vmatprep.subr.mxu0 0.0
  %2128 = vmatpush1.msra.mxu0 0.0
  %2129 = vmatprep.subr.mxu0 0.0
  %2130 = vmatpush1.msra.mxu0 0.0
  %2131 = vmatprep.subr.mxu0 0.0
  %2132 = vmatpush1.msra.mxu0 0.0
  %2133 = vmatprep.subr.mxu0 0.0
  %2134 = vmatpush1.msra.mxu0 0.0
  %2135 = vmatprep.subr.mxu0 0.0
  %2136 = vmatpush1.msra.mxu0 0.0
  %2137 = vmatprep.subr.mxu0 0.0
  %2138 = vmatpush1.msra.mxu0 0.0
  %2139 = vmatprep.subr.mxu0 0.0
  %2140 = vmatpush1.msra.mxu0 0.0
  %2141 = vmatprep.subr.mxu0 0.0
  %2142 = vmatpush1.msra.mxu0 0.0
  %2143 = vmatprep.subr.mxu0 0.0
  %2144 = vmatpush1.msra.mxu0 0.0
  %2145 = vmatprep.mubr.f32.mxu0 0.0
  %2146 = vmatmul.mubr.f32.gmra.mrb[0].mxu0 %v2079
  %v2147 = vpop.f32.mrb[0].mxu0
  %v2148 = vadd.f32 %v2077, %v2147
  %v2149 = vpop.f32.mrb[0].mxu0
  %2150 = vdwg.mxu0
  %vm2151 = vcmask 7168
  %2152 = vst.msk [vmem:[%s4] sm:$0xff] %vm2151, %v2148
  // Predicated region
  $region18: #{tpu_custom_call.1} parent=0 // pred_check
    _
  $region19: #{tpu_custom_call.1} parent=0 // pred_check_branch
    %2154 = sbr.rel (0) target = $region21
  $region20: #{tpu_custom_call.1} parent=0 // pred_region
    _
  $region21: #{tpu_custom_call.1} parent=0 // pred_fallthru
    _
  // Predicated region
  $region22: #{tpu_custom_call.1} parent=0 // pred_check
    _
  $region23: #{tpu_custom_call.1} parent=0 // pred_check_branch
    %2156 = sbr.rel (0) target = $region25
  $region24: #{tpu_custom_call.1} parent=0 // pred_region
    _
  $region25: #{tpu_custom_call.1} parent=0 // pred_fallthru
    _

</llo_original>
